<compile_context>
chip_gen: v5e
topology: v5e:2x2
jax: 0.10.0
libtpu: 0.0.40
codegen_flags: <defaults>
</compile_context>

<pallas_src>
import math
import jax
import jax.numpy as jnp
from jax import lax
from jax.experimental import pallas as pl
from jax.experimental.pallas import tpu as pltpu

# ----- small synthetic config (TinyBERT is 4L/312D/12H; scaled down here) -----
B = 2           # batch
S = 8           # sequence length
H = 128         # hidden size
NH = 2          # attention heads
HD = H // NH    # head dim
I = 256         # FFN intermediate size
V = 64          # len_tokenizer (resized vocab)
NLAYERS = 2
BS = B * S
EPS = 1e-12


# --------------------------- in-kernel helpers -------------------------------
def _ln(x, g, b):
    mu = jnp.mean(x, axis=-1, keepdims=True)
    var = jnp.mean((x - mu) ** 2, axis=-1, keepdims=True)
    return (x - mu) * lax.rsqrt(var + EPS) * g + b


def _gelu(x):
    # TODO(synk): HF BERT default "gelu" is erf-based; tanh approximation used here.
    return 0.5 * x * (1.0 + jnp.tanh(0.7978845608028654 * (x + 0.044715 * x * x * x)))


# ------------------------------- fused kernel --------------------------------
def encoder_kernel(x_emb_ref, emb_g_ref, emb_b_ref, bias_ref,
                   wqkv_ref, bqkv_ref, wo_ref, bo_ref, ln1g_ref, ln1b_ref,
                   wi_ref, bi_ref, wf_ref, bf_ref, ln2g_ref, ln2b_ref,
                   pw_ref, pb_ref,
                   hidden_ref, pooled_ref,
                   x_scr):
    l = pl.program_id(0)

    # Layer 0: embedding LayerNorm into the resident activation scratch.
    @pl.when(l == 0)
    def _():
        x_scr[...] = _ln(x_emb_ref[...].astype(jnp.float32),
                         emb_g_ref[...], emb_b_ref[...])

    x = x_scr[...]                              # [BS, H] f32, resident across layers
    x_b = x.astype(jnp.bfloat16)

    # Fused Q/K/V projection: one [BS,H] x [H,3H] MXU op.
    qkv = jnp.dot(x_b, wqkv_ref[0],
                  preferred_element_type=jnp.float32) + bqkv_ref[0]   # [BS, 3H] f32
    scale = 1.0 / math.sqrt(HD)
    q = qkv[:, 0 * H:1 * H] * scale            # fold 1/sqrt(HD) into q once
    k = qkv[:, 1 * H:2 * H]
    v = qkv[:, 2 * H:3 * H]

    bias = bias_ref[...]                        # [BS, BS] f32 block-diag + padding mask
    wo = wo_ref[0]                              # [H, H] bf16

    attn = jnp.zeros((BS, H), jnp.float32)
    for h in range(NH):                         # static unroll over heads
        sl = slice(h * HD, (h + 1) * HD)
        qh = q[:, sl].astype(jnp.bfloat16)
        kh = k[:, sl].astype(jnp.bfloat16)
        vh = v[:, sl].astype(jnp.bfloat16)
        # scores: contract last dims directly (no materialized transpose)
        s = lax.dot_general(qh, kh, (((1,), (1,)), ((), ())),
                            preferred_element_type=jnp.float32) + bias   # [BS, BS]
        s = s - jnp.max(s, axis=-1, keepdims=True)
        p = jnp.exp(s)
        p = p * pl.reciprocal(jnp.sum(p, axis=-1, keepdims=True), approx=True)
        ctx = jnp.dot(p.astype(jnp.bfloat16), vh,
                      preferred_element_type=jnp.float32)                # [BS, HD]
        # accumulate through the per-head slice of the output projection (no concat)
        attn = attn + jnp.dot(ctx.astype(jnp.bfloat16), wo[sl, :],
                              preferred_element_type=jnp.float32)
    attn = attn + bo_ref[0]

    x1 = _ln(attn + x, ln1g_ref[0], ln1b_ref[0])                         # [BS, H] f32

    hmid = _gelu(jnp.dot(x1.astype(jnp.bfloat16), wi_ref[0],
                         preferred_element_type=jnp.float32) + bi_ref[0])
    ffn = jnp.dot(hmid.astype(jnp.bfloat16), wf_ref[0],
                  preferred_element_type=jnp.float32) + bf_ref[0]
    x2 = _ln(ffn + x1, ln2g_ref[0], ln2b_ref[0])

    x_scr[...] = x2                             # carry to next layer (stays in VMEM)

    # Final layer: emit last_hidden_state and the fused pooler output.
    @pl.when(l == pl.num_programs(0) - 1)
    def _():
        hidden_ref[...] = x2.astype(hidden_ref.dtype)
        cls = x2.reshape(B, S, H)[:, 0, :]      # [B, H] (row 0 of each sequence)
        pooled_ref[...] = jnp.tanh(
            jnp.dot(cls.astype(jnp.bfloat16), pw_ref[...],
                    preferred_element_type=jnp.float32) + pb_ref[...])


# ------------------------------ wrapper ---------------------------------------
def pallas_encoder(emb_flat, bias2d, p):
    def full(a):
        return pl.BlockSpec(a.shape, lambda l, n=a.ndim: (0,) * n)

    def layered(a):  # per-layer stacked weight: pick layer `l` off the leading axis
        return pl.BlockSpec((1,) + a.shape[1:], lambda l: (l, 0, 0))

    stacked_keys = ["wqkv", "bqkv", "wo", "bo", "ln1_g", "ln1_b",
                    "wi", "bi", "wf", "bf", "ln2_g", "ln2_b"]
    inputs = [emb_flat, p["emb_ln_g"], p["emb_ln_b"], bias2d]
    inputs += [p[k] for k in stacked_keys]
    inputs += [p["pooler_w"], p["pooler_b"]]

    in_specs = [full(emb_flat), full(p["emb_ln_g"]), full(p["emb_ln_b"]), full(bias2d)]
    in_specs += [layered(p[k]) for k in stacked_keys]
    in_specs += [full(p["pooler_w"]), full(p["pooler_b"])]

    return pl.pallas_call(
        encoder_kernel,
        out_shape=(jax.ShapeDtypeStruct((BS, H), jnp.float32),
                   jax.ShapeDtypeStruct((B, H), jnp.float32)),
        grid_spec=pltpu.PrefetchScalarGridSpec(
            num_scalar_prefetch=0,
            grid=(NLAYERS,),
            in_specs=in_specs,
            out_specs=(pl.BlockSpec((BS, H), lambda l: (0, 0)),
                       pl.BlockSpec((B, H), lambda l: (0, 0))),
            scratch_shapes=[pltpu.VMEM((BS, H), jnp.float32)]),
        compiler_params=pltpu.CompilerParams(
            dimension_semantics=("arbitrary",)),   # layers carry state -> sequential
    )(*inputs)


# --------------------------- parameter creation --------------------------------
def make_params(key):
    def nrm(k, shape):
        return (0.02 * jax.random.normal(k, shape, dtype=jnp.float32)).astype(jnp.bfloat16)

    keys = jax.random.split(key, 4 + NLAYERS)
    wqkv, wo, wi, wf = [], [], [], []
    for l in range(NLAYERS):
        lk = jax.random.split(keys[4 + l], 5)
        wq, wk, wv = nrm(lk[0], (H, H)), nrm(lk[1], (H, H)), nrm(lk[2], (H, H))
        wqkv.append(jnp.concatenate([wq, wk, wv], axis=1))       # [H, 3H]
        wo.append(nrm(lk[3], (H, H)))
        wi.append(nrm(lk[4], (H, I)))
        wf.append(nrm(jax.random.fold_in(lk[4], 1), (I, H)))

    z = lambda *s: jnp.zeros(s, jnp.float32)
    o = lambda *s: jnp.ones(s, jnp.float32)
    params = {
        # embeddings / pooler (f32 except pooler weight, which feeds the MXU)
        "word_emb": (0.02 * jax.random.normal(keys[0], (V, H))).astype(jnp.float32),
        "pos_emb": (0.02 * jax.random.normal(keys[1], (S, H))).astype(jnp.float32),
        "type_emb": (0.02 * jax.random.normal(keys[2], (2, H))).astype(jnp.float32),
        "emb_ln_g": o(1, H), "emb_ln_b": z(1, H),
        "pooler_w": nrm(keys[3], (H, H)), "pooler_b": z(1, H),
        # per-layer stacked (leading NLAYERS axis); matmul weights bf16, rest f32
        "wqkv": jnp.stack(wqkv), "bqkv": z(NLAYERS, 1, 3 * H),
        "wo": jnp.stack(wo), "bo": z(NLAYERS, 1, H),
        "ln1_g": o(NLAYERS, 1, H), "ln1_b": z(NLAYERS, 1, H),
        "wi": jnp.stack(wi), "bi": z(NLAYERS, 1, I),
        "wf": jnp.stack(wf), "bf": z(NLAYERS, 1, H),
        "ln2_g": o(NLAYERS, 1, H), "ln2_b": z(NLAYERS, 1, H),
    }
    return params


# ------------------------------ forward pass -----------------------------------
def base_encoder_forward(params, input_ids, attention_mask):
    # embeddings (gather glue in plain JAX), token_type_ids = 0
    we = jnp.take(params["word_emb"], input_ids, axis=0)              # [B, S, H]
    pe = params["pos_emb"][None, :, :]
    te = params["type_emb"][0][None, None, :]
    emb_flat = (we + pe + te).astype(jnp.float32).reshape(BS, H)

    # additive attention bias [BS, BS]: block-diagonal over sequences + key padding
    m = attention_mask.astype(jnp.float32).reshape(BS)
    rows = jnp.arange(BS)
    same_seq = (rows[:, None] // S) == (rows[None, :] // S)
    bias2d = jnp.where(same_seq & (m[None, :] > 0.5), 0.0, -1e9).astype(jnp.float32)

    hidden_flat, pooled = pallas_encoder(emb_flat, bias2d, params)
    # mirrors HF BaseModelOutputWithPooling: (last_hidden_state, pooler_output)
    return hidden_flat.reshape(B, S, H), pooled


# --------------------------- plain-JAX reference --------------------------------
def reference_forward(params, input_ids, attention_mask):
    bf, f32 = jnp.bfloat16, jnp.float32
    we = jnp.take(params["word_emb"], input_ids, axis=0)
    x = _ln((we + params["pos_emb"][None] + params["type_emb"][0][None, None, :]).astype(f32),
            params["emb_ln_g"], params["emb_ln_b"])                   # [B, S, H]
    bias = (1.0 - attention_mask.astype(f32)) * -1e9                  # [B, S] (key mask)
    scale = 1.0 / math.sqrt(HD)
    for l in range(NLAYERS):
        qkv = jnp.einsum("bsh,hd->bsd", x.astype(bf), params["wqkv"][l],
                         preferred_element_type=f32) + params["bqkv"][l]
        q = (qkv[..., :H] * scale).reshape(B, S, NH, HD)
        k = qkv[..., H:2 * H].reshape(B, S, NH, HD)
        v = qkv[..., 2 * H:].reshape(B, S, NH, HD)
        s = jnp.einsum("bqnd,bknd->bnqk", q.astype(bf), k.astype(bf),
                       preferred_element_type=f32) + bias[:, None, None, :]
        p = jax.nn.softmax(s, axis=-1)
        ctx = jnp.einsum("bnqk,bknd->bqnd", p.astype(bf), v.astype(bf),
                         preferred_element_type=f32).reshape(B, S, H)
        attn = jnp.einsum("bsh,hd->bsd", ctx.astype(bf), params["wo"][l],
                          preferred_element_type=f32) + params["bo"][l]
        x1 = _ln(attn + x, params["ln1_g"][l], params["ln1_b"][l])
        hmid = _gelu(jnp.einsum("bsh,hi->bsi", x1.astype(bf), params["wi"][l],
                                preferred_element_type=f32) + params["bi"][l])
        ffn = jnp.einsum("bsi,ih->bsh", hmid.astype(bf), params["wf"][l],
                         preferred_element_type=f32) + params["bf"][l]
        x = _ln(ffn + x1, params["ln2_g"][l], params["ln2_b"][l])
    pooled = jnp.tanh(jnp.dot(x[:, 0, :].astype(bf), params["pooler_w"],
                              preferred_element_type=f32) + params["pooler_b"])
    return x, pooled


if __name__ == "__main__":
    key = jax.random.PRNGKey(0)
    pkey, ikey = jax.random.split(key)
    params = make_params(pkey)

    input_ids = jax.random.randint(ikey, (B, S), 0, V, dtype=jnp.int32)
    attention_mask = jnp.ones((B, S), jnp.int32).at[1, S - 2:].set(0)  # pad tail of 2nd seq

    fwd = jax.jit(base_encoder_forward)
    last_hidden, pooled = fwd(params, input_ids, attention_mask)
    jax.block_until_ready((last_hidden, pooled))
    assert last_hidden.shape == (B, S, H) and pooled.shape == (B, H)
    assert bool(jnp.isfinite(last_hidden).all()) and bool(jnp.isfinite(pooled).all())

    # correctness check vs plain-JAX reference (approx reciprocal / fp reorder tolerance)
    ref_hidden, ref_pooled = reference_forward(params, input_ids, attention_mask)
    assert float(jnp.max(jnp.abs(last_hidden - ref_hidden))) < 5e-2
    assert float(jnp.max(jnp.abs(pooled - ref_pooled))) < 5e-2

    print("KERNEL_OK")
</pallas_src>

<mosaic_0001>
module attributes {stable_mosaic.version = 11 : i64} {
  func.func @encoder_kernel(%arg0: i32, %arg1: memref<16x128xf32, #tpu.memory_space<vmem>>, %arg2: memref<1x128xf32, #tpu.memory_space<vmem>>, %arg3: memref<1x128xf32, #tpu.memory_space<vmem>>, %arg4: memref<16x16xf32, #tpu.memory_space<vmem>>, %arg5: memref<1x128x384xbf16, #tpu.memory_space<vmem>>, %arg6: memref<1x1x384xf32, #tpu.memory_space<vmem>>, %arg7: memref<1x128x128xbf16, #tpu.memory_space<vmem>>, %arg8: memref<1x1x128xf32, #tpu.memory_space<vmem>>, %arg9: memref<1x1x128xf32, #tpu.memory_space<vmem>>, %arg10: memref<1x1x128xf32, #tpu.memory_space<vmem>>, %arg11: memref<1x128x256xbf16, #tpu.memory_space<vmem>>, %arg12: memref<1x1x256xf32, #tpu.memory_space<vmem>>, %arg13: memref<1x256x128xbf16, #tpu.memory_space<vmem>>, %arg14: memref<1x1x128xf32, #tpu.memory_space<vmem>>, %arg15: memref<1x1x128xf32, #tpu.memory_space<vmem>>, %arg16: memref<1x1x128xf32, #tpu.memory_space<vmem>>, %arg17: memref<128x128xbf16, #tpu.memory_space<vmem>>, %arg18: memref<1x128xf32, #tpu.memory_space<vmem>>, %arg19: memref<16x128xf32, #tpu.memory_space<vmem>>, %arg20: memref<2x128xf32, #tpu.memory_space<vmem>>, %arg21: memref<16x128xf32, #tpu.memory_space<vmem>>) attributes {dimension_semantics = [#tpu.dimension_semantics<arbitrary>], iteration_bounds = array<i64: 2>, scalar_prefetch = 0 : i64, scratch_operands = 1 : i64, tpu.core_type = #tpu.core_type<tc>, window_params = [{pipeline_mode = #tpu.pipeline_mode<synchronous>, transform_indices = @transform_0, window_bounds = array<i64: 16, 128>}, {pipeline_mode = #tpu.pipeline_mode<synchronous>, transform_indices = @transform_1, window_bounds = array<i64: 1, 128>}, {pipeline_mode = #tpu.pipeline_mode<synchronous>, transform_indices = @transform_2, window_bounds = array<i64: 1, 128>}, {pipeline_mode = #tpu.pipeline_mode<synchronous>, transform_indices = @transform_3, window_bounds = array<i64: 16, 16>}, {transform_indices = @transform_4, window_bounds = array<i64: 1, 128, 384>}, {transform_indices = @transform_5, window_bounds = array<i64: 1, 1, 384>}, {transform_indices = @transform_6, window_bounds = array<i64: 1, 128, 128>}, {transform_indices = @transform_7, window_bounds = array<i64: 1, 1, 128>}, {transform_indices = @transform_8, window_bounds = array<i64: 1, 1, 128>}, {transform_indices = @transform_9, window_bounds = array<i64: 1, 1, 128>}, {transform_indices = @transform_10, window_bounds = array<i64: 1, 128, 256>}, {transform_indices = @transform_11, window_bounds = array<i64: 1, 1, 256>}, {transform_indices = @transform_12, window_bounds = array<i64: 1, 256, 128>}, {transform_indices = @transform_13, window_bounds = array<i64: 1, 1, 128>}, {transform_indices = @transform_14, window_bounds = array<i64: 1, 1, 128>}, {transform_indices = @transform_15, window_bounds = array<i64: 1, 1, 128>}, {pipeline_mode = #tpu.pipeline_mode<synchronous>, transform_indices = @transform_16, window_bounds = array<i64: 128, 128>}, {pipeline_mode = #tpu.pipeline_mode<synchronous>, transform_indices = @transform_17, window_bounds = array<i64: 1, 128>}, {pipeline_mode = #tpu.pipeline_mode<synchronous>, transform_indices = @transform_18, window_bounds = array<i64: 16, 128>}, {pipeline_mode = #tpu.pipeline_mode<synchronous>, transform_indices = @transform_19, window_bounds = array<i64: 2, 128>}]} {
    %c0_i32 = arith.constant 0 : i32
    %0 = arith.cmpi eq, %arg0, %c0_i32 : i32
    %1 = arith.extui %0 : i1 to i32
    %c0_i32_0 = arith.constant 0 : i32
    %2 = arith.cmpi ne, %1, %c0_i32_0 : i32
    scf.if %2 {
      %c0_71 = arith.constant 0 : index
      %c0_72 = arith.constant 0 : index
      %160 = vector.load %arg1[%c0_71, %c0_72] : memref<16x128xf32, #tpu.memory_space<vmem>>, vector<16x128xf32>
      %c0_73 = arith.constant 0 : index
      %c0_74 = arith.constant 0 : index
      %161 = vector.load %arg2[%c0_73, %c0_74] : memref<1x128xf32, #tpu.memory_space<vmem>>, vector<1x128xf32>
      %c0_75 = arith.constant 0 : index
      %c0_76 = arith.constant 0 : index
      %162 = vector.load %arg3[%c0_75, %c0_76] : memref<1x128xf32, #tpu.memory_space<vmem>>, vector<1x128xf32>
      %cst_77 = arith.constant dense<0.000000e+00> : vector<16xf32>
      %163 = vector.multi_reduction <add>, %160, %cst_77 [1] : vector<16x128xf32> to vector<16xf32>
      %164 = vector.shape_cast %163 : vector<16xf32> to vector<16x1xf32>
      %cst_78 = arith.constant 1.280000e+02 : f32
      %165 = vector.broadcast %cst_78 : f32 to vector<16x1xf32>
      %166 = arith.divf %164, %165 : vector<16x1xf32>
      %167 = vector.broadcast %166 : vector<16x1xf32> to vector<16x128xf32>
      %168 = arith.subf %160, %167 : vector<16x128xf32>
      %169 = arith.mulf %168, %168 : vector<16x128xf32>
      %cst_79 = arith.constant dense<0.000000e+00> : vector<16xf32>
      %170 = vector.multi_reduction <add>, %169, %cst_79 [1] : vector<16x128xf32> to vector<16xf32>
      %171 = vector.shape_cast %170 : vector<16xf32> to vector<16x1xf32>
      %cst_80 = arith.constant 1.280000e+02 : f32
      %172 = vector.broadcast %cst_80 : f32 to vector<16x1xf32>
      %173 = arith.divf %171, %172 : vector<16x1xf32>
      %174 = vector.broadcast %166 : vector<16x1xf32> to vector<16x128xf32>
      %175 = arith.subf %160, %174 : vector<16x128xf32>
      %cst_81 = arith.constant 9.99999996E-13 : f32
      %176 = vector.broadcast %cst_81 : f32 to vector<16x1xf32>
      %177 = arith.addf %173, %176 : vector<16x1xf32>
      %178 = math.rsqrt %177 : vector<16x1xf32>
      %179 = vector.broadcast %178 : vector<16x1xf32> to vector<16x128xf32>
      %180 = arith.mulf %175, %179 : vector<16x128xf32>
      %181 = vector.broadcast %161 : vector<1x128xf32> to vector<16x128xf32>
      %182 = arith.mulf %180, %181 : vector<16x128xf32>
      %183 = vector.broadcast %162 : vector<1x128xf32> to vector<16x128xf32>
      %184 = arith.addf %182, %183 : vector<16x128xf32>
      %c0_82 = arith.constant 0 : index
      %c0_83 = arith.constant 0 : index
      %185 = vector.load %arg21[%c0_82, %c0_83] : memref<16x128xf32, #tpu.memory_space<vmem>>, vector<16x128xf32>
      tpu.vector_store %arg21[%c0_82, %c0_83], %184 {strides = array<i32>} : memref<16x128xf32, #tpu.memory_space<vmem>>, vector<16x128xf32>,
    } else {
    }
    %c0 = arith.constant 0 : index
    %c0_1 = arith.constant 0 : index
    %3 = vector.load %arg21[%c0, %c0_1] : memref<16x128xf32, #tpu.memory_space<vmem>>, vector<16x128xf32>
    %4 = arith.truncf %3 : vector<16x128xf32> to vector<16x128xbf16>
    %c0_2 = arith.constant 0 : index
    %c0_3 = arith.constant 0 : index
    %c0_4 = arith.constant 0 : index
    %5 = vector.load %arg5[%c0_2, %c0_3, %c0_4] : memref<1x128x384xbf16, #tpu.memory_space<vmem>>, vector<1x128x384xbf16>
    %6 = vector.shape_cast %5 : vector<1x128x384xbf16> to vector<128x384xbf16>
    %cst = arith.constant dense<0.000000e+00> : vector<16x384xf32>
    %7 = tpu.matmul %4, %6, %cst {dimension_numbers = #tpu.dot_dimension_numbers<[1], [0], [0], [1], [0, 0, 1, 1], [], []>} : vector<16x128xbf16>, vector<128x384xbf16>, vector<16x384xf32> -> vector<16x384xf32>
    %c0_5 = arith.constant 0 : index
    %c0_6 = arith.constant 0 : index
    %c0_7 = arith.constant 0 : index
    %8 = vector.load %arg6[%c0_5, %c0_6, %c0_7] : memref<1x1x384xf32, #tpu.memory_space<vmem>>, vector<1x1x384xf32>
    %9 = vector.shape_cast %8 : vector<1x1x384xf32> to vector<1x384xf32>
    %10 = vector.broadcast %9 : vector<1x384xf32> to vector<16x384xf32>
    %11 = arith.addf %7, %10 : vector<16x384xf32>
    %12 = vector.extract_strided_slice %11 {offsets = [0, 0], sizes = [16, 128], strides = [1, 1]} : vector<16x384xf32> to vector<16x128xf32>
    %cst_8 = arith.constant 1.250000e-01 : f32
    %13 = vector.broadcast %cst_8 : f32 to vector<16x128xf32>
    %14 = arith.mulf %12, %13 : vector<16x128xf32>
    %15 = vector.extract_strided_slice %11 {offsets = [0, 128], sizes = [16, 128], strides = [1, 1]} : vector<16x384xf32> to vector<16x128xf32>
    %16 = vector.extract_strided_slice %11 {offsets = [0, 256], sizes = [16, 128], strides = [1, 1]} : vector<16x384xf32> to vector<16x128xf32>
    %c0_9 = arith.constant 0 : index
    %c0_10 = arith.constant 0 : index
    %17 = vector.load %arg4[%c0_9, %c0_10] : memref<16x16xf32, #tpu.memory_space<vmem>>, vector<16x16xf32>
    %c0_11 = arith.constant 0 : index
    %c0_12 = arith.constant 0 : index
    %c0_13 = arith.constant 0 : index
    %18 = vector.load %arg7[%c0_11, %c0_12, %c0_13] : memref<1x128x128xbf16, #tpu.memory_space<vmem>>, vector<1x128x128xbf16>
    %19 = vector.shape_cast %18 : vector<1x128x128xbf16> to vector<128x128xbf16>
    %cst_14 = arith.constant 0.000000e+00 : f32
    %20 = vector.broadcast %cst_14 : f32 to vector<16x128xf32>
    %21 = vector.extract_strided_slice %14 {offsets = [0, 0], sizes = [16, 64], strides = [1, 1]} : vector<16x128xf32> to vector<16x64xf32>
    %22 = arith.truncf %21 : vector<16x64xf32> to vector<16x64xbf16>
    %23 = vector.extract_strided_slice %15 {offsets = [0, 0], sizes = [16, 64], strides = [1, 1]} : vector<16x128xf32> to vector<16x64xf32>
    %24 = arith.truncf %23 : vector<16x64xf32> to vector<16x64xbf16>
    %25 = vector.extract_strided_slice %16 {offsets = [0, 0], sizes = [16, 64], strides = [1, 1]} : vector<16x128xf32> to vector<16x64xf32>
    %26 = arith.truncf %25 : vector<16x64xf32> to vector<16x64xbf16>
    %cst_15 = arith.constant dense<0.000000e+00> : vector<16x16xf32>
    %27 = tpu.matmul %22, %24, %cst_15 {dimension_numbers = #tpu.dot_dimension_numbers<[1], [1], [0], [0], [0, 0, 1, 0], [], []>} : vector<16x64xbf16>, vector<16x64xbf16>, vector<16x16xf32> -> vector<16x16xf32>
    %28 = arith.addf %27, %17 : vector<16x16xf32>
    %cst_16 = arith.constant dense<0xFF800000> : vector<16xf32>
    %29 = vector.multi_reduction <maximumf>, %28, %cst_16 [1] : vector<16x16xf32> to vector<16xf32>
    %30 = vector.shape_cast %29 : vector<16xf32> to vector<16x1xf32>
    %31 = vector.broadcast %30 : vector<16x1xf32> to vector<16x16xf32>
    %32 = arith.subf %28, %31 : vector<16x16xf32>
    %33 = math.exp %32 : vector<16x16xf32>
    %cst_17 = arith.constant dense<0.000000e+00> : vector<16xf32>
    %34 = vector.multi_reduction <add>, %33, %cst_17 [1] : vector<16x16xf32> to vector<16xf32>
    %35 = vector.shape_cast %34 : vector<16xf32> to vector<16x1xf32>
    %36 = tpu.reciprocal %35 {approx = true} : vector<16x1xf32> -> vector<16x1xf32>
    %37 = vector.broadcast %36 : vector<16x1xf32> to vector<16x16xf32>
    %38 = arith.mulf %33, %37 : vector<16x16xf32>
    %39 = arith.truncf %38 : vector<16x16xf32> to vector<16x16xbf16>
    %cst_18 = arith.constant dense<0.000000e+00> : vector<16x64xf32>
    %40 = tpu.matmul %39, %26, %cst_18 {dimension_numbers = #tpu.dot_dimension_numbers<[1], [0], [0], [1], [0, 0, 1, 1], [], []>} : vector<16x16xbf16>, vector<16x64xbf16>, vector<16x64xf32> -> vector<16x64xf32>
    %41 = arith.truncf %40 : vector<16x64xf32> to vector<16x64xbf16>
    %42 = vector.extract_strided_slice %19 {offsets = [0, 0], sizes = [64, 128], strides = [1, 1]} : vector<128x128xbf16> to vector<64x128xbf16>
    %cst_19 = arith.constant dense<0.000000e+00> : vector<16x128xf32>
    %43 = tpu.matmul %41, %42, %cst_19 {dimension_numbers = #tpu.dot_dimension_numbers<[1], [0], [0], [1], [0, 0, 1, 1], [], []>} : vector<16x64xbf16>, vector<64x128xbf16>, vector<16x128xf32> -> vector<16x128xf32>
    %44 = arith.addf %20, %43 : vector<16x128xf32>
    %45 = vector.extract_strided_slice %14 {offsets = [0, 64], sizes = [16, 64], strides = [1, 1]} : vector<16x128xf32> to vector<16x64xf32>
    %46 = arith.truncf %45 : vector<16x64xf32> to vector<16x64xbf16>
    %47 = vector.extract_strided_slice %15 {offsets = [0, 64], sizes = [16, 64], strides = [1, 1]} : vector<16x128xf32> to vector<16x64xf32>
    %48 = arith.truncf %47 : vector<16x64xf32> to vector<16x64xbf16>
    %49 = vector.extract_strided_slice %16 {offsets = [0, 64], sizes = [16, 64], strides = [1, 1]} : vector<16x128xf32> to vector<16x64xf32>
    %50 = arith.truncf %49 : vector<16x64xf32> to vector<16x64xbf16>
    %cst_20 = arith.constant dense<0.000000e+00> : vector<16x16xf32>
    %51 = tpu.matmul %46, %48, %cst_20 {dimension_numbers = #tpu.dot_dimension_numbers<[1], [1], [0], [0], [0, 0, 1, 0], [], []>} : vector<16x64xbf16>, vector<16x64xbf16>, vector<16x16xf32> -> vector<16x16xf32>
    %52 = arith.addf %51, %17 : vector<16x16xf32>
    %cst_21 = arith.constant dense<0xFF800000> : vector<16xf32>
    %53 = vector.multi_reduction <maximumf>, %52, %cst_21 [1] : vector<16x16xf32> to vector<16xf32>
    %54 = vector.shape_cast %53 : vector<16xf32> to vector<16x1xf32>
    %55 = vector.broadcast %54 : vector<16x1xf32> to vector<16x16xf32>
    %56 = arith.subf %52, %55 : vector<16x16xf32>
    %57 = math.exp %56 : vector<16x16xf32>
    %cst_22 = arith.constant dense<0.000000e+00> : vector<16xf32>
    %58 = vector.multi_reduction <add>, %57, %cst_22 [1] : vector<16x16xf32> to vector<16xf32>
    %59 = vector.shape_cast %58 : vector<16xf32> to vector<16x1xf32>
    %60 = tpu.reciprocal %59 {approx = true} : vector<16x1xf32> -> vector<16x1xf32>
    %61 = vector.broadcast %60 : vector<16x1xf32> to vector<16x16xf32>
    %62 = arith.mulf %57, %61 : vector<16x16xf32>
    %63 = arith.truncf %62 : vector<16x16xf32> to vector<16x16xbf16>
    %cst_23 = arith.constant dense<0.000000e+00> : vector<16x64xf32>
    %64 = tpu.matmul %63, %50, %cst_23 {dimension_numbers = #tpu.dot_dimension_numbers<[1], [0], [0], [1], [0, 0, 1, 1], [], []>} : vector<16x16xbf16>, vector<16x64xbf16>, vector<16x64xf32> -> vector<16x64xf32>
    %65 = arith.truncf %64 : vector<16x64xf32> to vector<16x64xbf16>
    %66 = vector.extract_strided_slice %19 {offsets = [64, 0], sizes = [64, 128], strides = [1, 1]} : vector<128x128xbf16> to vector<64x128xbf16>
    %cst_24 = arith.constant dense<0.000000e+00> : vector<16x128xf32>
    %67 = tpu.matmul %65, %66, %cst_24 {dimension_numbers = #tpu.dot_dimension_numbers<[1], [0], [0], [1], [0, 0, 1, 1], [], []>} : vector<16x64xbf16>, vector<64x128xbf16>, vector<16x128xf32> -> vector<16x128xf32>
    %68 = arith.addf %44, %67 : vector<16x128xf32>
    %c0_25 = arith.constant 0 : index
    %c0_26 = arith.constant 0 : index
    %c0_27 = arith.constant 0 : index
    %69 = vector.load %arg8[%c0_25, %c0_26, %c0_27] : memref<1x1x128xf32, #tpu.memory_space<vmem>>, vector<1x1x128xf32>
    %70 = vector.shape_cast %69 : vector<1x1x128xf32> to vector<1x128xf32>
    %71 = vector.broadcast %70 : vector<1x128xf32> to vector<16x128xf32>
    %72 = arith.addf %68, %71 : vector<16x128xf32>
    %73 = arith.addf %72, %3 : vector<16x128xf32>
    %c0_28 = arith.constant 0 : index
    %c0_29 = arith.constant 0 : index
    %c0_30 = arith.constant 0 : index
    %74 = vector.load %arg9[%c0_28, %c0_29, %c0_30] : memref<1x1x128xf32, #tpu.memory_space<vmem>>, vector<1x1x128xf32>
    %75 = vector.shape_cast %74 : vector<1x1x128xf32> to vector<1x128xf32>
    %c0_31 = arith.constant 0 : index
    %c0_32 = arith.constant 0 : index
    %c0_33 = arith.constant 0 : index
    %76 = vector.load %arg10[%c0_31, %c0_32, %c0_33] : memref<1x1x128xf32, #tpu.memory_space<vmem>>, vector<1x1x128xf32>
    %77 = vector.shape_cast %76 : vector<1x1x128xf32> to vector<1x128xf32>
    %cst_34 = arith.constant dense<0.000000e+00> : vector<16xf32>
    %78 = vector.multi_reduction <add>, %73, %cst_34 [1] : vector<16x128xf32> to vector<16xf32>
    %79 = vector.shape_cast %78 : vector<16xf32> to vector<16x1xf32>
    %cst_35 = arith.constant 1.280000e+02 : f32
    %80 = vector.broadcast %cst_35 : f32 to vector<16x1xf32>
    %81 = arith.divf %79, %80 : vector<16x1xf32>
    %82 = vector.broadcast %81 : vector<16x1xf32> to vector<16x128xf32>
    %83 = arith.subf %73, %82 : vector<16x128xf32>
    %84 = arith.mulf %83, %83 : vector<16x128xf32>
    %cst_36 = arith.constant dense<0.000000e+00> : vector<16xf32>
    %85 = vector.multi_reduction <add>, %84, %cst_36 [1] : vector<16x128xf32> to vector<16xf32>
    %86 = vector.shape_cast %85 : vector<16xf32> to vector<16x1xf32>
    %cst_37 = arith.constant 1.280000e+02 : f32
    %87 = vector.broadcast %cst_37 : f32 to vector<16x1xf32>
    %88 = arith.divf %86, %87 : vector<16x1xf32>
    %89 = vector.broadcast %81 : vector<16x1xf32> to vector<16x128xf32>
    %90 = arith.subf %73, %89 : vector<16x128xf32>
    %cst_38 = arith.constant 9.99999996E-13 : f32
    %91 = vector.broadcast %cst_38 : f32 to vector<16x1xf32>
    %92 = arith.addf %88, %91 : vector<16x1xf32>
    %93 = math.rsqrt %92 : vector<16x1xf32>
    %94 = vector.broadcast %93 : vector<16x1xf32> to vector<16x128xf32>
    %95 = arith.mulf %90, %94 : vector<16x128xf32>
    %96 = vector.broadcast %75 : vector<1x128xf32> to vector<16x128xf32>
    %97 = arith.mulf %95, %96 : vector<16x128xf32>
    %98 = vector.broadcast %77 : vector<1x128xf32> to vector<16x128xf32>
    %99 = arith.addf %97, %98 : vector<16x128xf32>
    %100 = arith.truncf %99 : vector<16x128xf32> to vector<16x128xbf16>
    %c0_39 = arith.constant 0 : index
    %c0_40 = arith.constant 0 : index
    %c0_41 = arith.constant 0 : index
    %101 = vector.load %arg11[%c0_39, %c0_40, %c0_41] : memref<1x128x256xbf16, #tpu.memory_space<vmem>>, vector<1x128x256xbf16>
    %102 = vector.shape_cast %101 : vector<1x128x256xbf16> to vector<128x256xbf16>
    %cst_42 = arith.constant dense<0.000000e+00> : vector<16x256xf32>
    %103 = tpu.matmul %100, %102, %cst_42 {dimension_numbers = #tpu.dot_dimension_numbers<[1], [0], [0], [1], [0, 0, 1, 1], [], []>} : vector<16x128xbf16>, vector<128x256xbf16>, vector<16x256xf32> -> vector<16x256xf32>
    %c0_43 = arith.constant 0 : index
    %c0_44 = arith.constant 0 : index
    %c0_45 = arith.constant 0 : index
    %104 = vector.load %arg12[%c0_43, %c0_44, %c0_45] : memref<1x1x256xf32, #tpu.memory_space<vmem>>, vector<1x1x256xf32>
    %105 = vector.shape_cast %104 : vector<1x1x256xf32> to vector<1x256xf32>
    %106 = vector.broadcast %105 : vector<1x256xf32> to vector<16x256xf32>
    %107 = arith.addf %103, %106 : vector<16x256xf32>
    %cst_46 = arith.constant 5.000000e-01 : f32
    %108 = vector.broadcast %cst_46 : f32 to vector<16x256xf32>
    %109 = arith.mulf %108, %107 : vector<16x256xf32>
    %cst_47 = arith.constant 4.471500e-02 : f32
    %110 = vector.broadcast %cst_47 : f32 to vector<16x256xf32>
    %111 = arith.mulf %110, %107 : vector<16x256xf32>
    %112 = arith.mulf %111, %107 : vector<16x256xf32>
    %113 = arith.mulf %112, %107 : vector<16x256xf32>
    %114 = arith.addf %107, %113 : vector<16x256xf32>
    %cst_48 = arith.constant 0.797884583 : f32
    %115 = vector.broadcast %cst_48 : f32 to vector<16x256xf32>
    %116 = arith.mulf %115, %114 : vector<16x256xf32>
    %117 = math.tanh %116 : vector<16x256xf32>
    %cst_49 = arith.constant 1.000000e+00 : f32
    %118 = vector.broadcast %cst_49 : f32 to vector<16x256xf32>
    %119 = arith.addf %118, %117 : vector<16x256xf32>
    %120 = arith.mulf %109, %119 : vector<16x256xf32>
    %121 = arith.truncf %120 : vector<16x256xf32> to vector<16x256xbf16>
    %c0_50 = arith.constant 0 : index
    %c0_51 = arith.constant 0 : index
    %c0_52 = arith.constant 0 : index
    %122 = vector.load %arg13[%c0_50, %c0_51, %c0_52] : memref<1x256x128xbf16, #tpu.memory_space<vmem>>, vector<1x256x128xbf16>
    %123 = vector.shape_cast %122 : vector<1x256x128xbf16> to vector<256x128xbf16>
    %cst_53 = arith.constant dense<0.000000e+00> : vector<16x128xf32>
    %124 = tpu.matmul %121, %123, %cst_53 {dimension_numbers = #tpu.dot_dimension_numbers<[1], [0], [0], [1], [0, 0, 1, 1], [], []>} : vector<16x256xbf16>, vector<256x128xbf16>, vector<16x128xf32> -> vector<16x128xf32>
    %c0_54 = arith.constant 0 : index
    %c0_55 = arith.constant 0 : index
    %c0_56 = arith.constant 0 : index
    %125 = vector.load %arg14[%c0_54, %c0_55, %c0_56] : memref<1x1x128xf32, #tpu.memory_space<vmem>>, vector<1x1x128xf32>
    %126 = vector.shape_cast %125 : vector<1x1x128xf32> to vector<1x128xf32>
    %127 = vector.broadcast %126 : vector<1x128xf32> to vector<16x128xf32>
    %128 = arith.addf %124, %127 : vector<16x128xf32>
    %129 = arith.addf %128, %99 : vector<16x128xf32>
    %c0_57 = arith.constant 0 : index
    %c0_58 = arith.constant 0 : index
    %c0_59 = arith.constant 0 : index
    %130 = vector.load %arg15[%c0_57, %c0_58, %c0_59] : memref<1x1x128xf32, #tpu.memory_space<vmem>>, vector<1x1x128xf32>
    %131 = vector.shape_cast %130 : vector<1x1x128xf32> to vector<1x128xf32>
    %c0_60 = arith.constant 0 : index
    %c0_61 = arith.constant 0 : index
    %c0_62 = arith.constant 0 : index
    %132 = vector.load %arg16[%c0_60, %c0_61, %c0_62] : memref<1x1x128xf32, #tpu.memory_space<vmem>>, vector<1x1x128xf32>
    %133 = vector.shape_cast %132 : vector<1x1x128xf32> to vector<1x128xf32>
    %cst_63 = arith.constant dense<0.000000e+00> : vector<16xf32>
    %134 = vector.multi_reduction <add>, %129, %cst_63 [1] : vector<16x128xf32> to vector<16xf32>
    %135 = vector.shape_cast %134 : vector<16xf32> to vector<16x1xf32>
    %cst_64 = arith.constant 1.280000e+02 : f32
    %136 = vector.broadcast %cst_64 : f32 to vector<16x1xf32>
    %137 = arith.divf %135, %136 : vector<16x1xf32>
    %138 = vector.broadcast %137 : vector<16x1xf32> to vector<16x128xf32>
    %139 = arith.subf %129, %138 : vector<16x128xf32>
    %140 = arith.mulf %139, %139 : vector<16x128xf32>
    %cst_65 = arith.constant dense<0.000000e+00> : vector<16xf32>
    %141 = vector.multi_reduction <add>, %140, %cst_65 [1] : vector<16x128xf32> to vector<16xf32>
    %142 = vector.shape_cast %141 : vector<16xf32> to vector<16x1xf32>
    %cst_66 = arith.constant 1.280000e+02 : f32
    %143 = vector.broadcast %cst_66 : f32 to vector<16x1xf32>
    %144 = arith.divf %142, %143 : vector<16x1xf32>
    %145 = vector.broadcast %137 : vector<16x1xf32> to vector<16x128xf32>
    %146 = arith.subf %129, %145 : vector<16x128xf32>
    %cst_67 = arith.constant 9.99999996E-13 : f32
    %147 = vector.broadcast %cst_67 : f32 to vector<16x1xf32>
    %148 = arith.addf %144, %147 : vector<16x1xf32>
    %149 = math.rsqrt %148 : vector<16x1xf32>
    %150 = vector.broadcast %149 : vector<16x1xf32> to vector<16x128xf32>
    %151 = arith.mulf %146, %150 : vector<16x128xf32>
    %152 = vector.broadcast %131 : vector<1x128xf32> to vector<16x128xf32>
    %153 = arith.mulf %151, %152 : vector<16x128xf32>
    %154 = vector.broadcast %133 : vector<1x128xf32> to vector<16x128xf32>
    %155 = arith.addf %153, %154 : vector<16x128xf32>
    %c0_68 = arith.constant 0 : index
    %c0_69 = arith.constant 0 : index
    %156 = vector.load %arg21[%c0_68, %c0_69] : memref<16x128xf32, #tpu.memory_space<vmem>>, vector<16x128xf32>
    tpu.vector_store %arg21[%c0_68, %c0_69], %155 {strides = array<i32>} : memref<16x128xf32, #tpu.memory_space<vmem>>, vector<16x128xf32>,
    %c1_i32 = arith.constant 1 : i32
    %157 = arith.cmpi eq, %arg0, %c1_i32 : i32
    %158 = arith.extui %157 : i1 to i32
    %c0_i32_70 = arith.constant 0 : i32
    %159 = arith.cmpi ne, %158, %c0_i32_70 : i32
    scf.if %159 {
      %c0_71 = arith.constant 0 : index
      %c0_72 = arith.constant 0 : index
      %160 = vector.load %arg19[%c0_71, %c0_72] : memref<16x128xf32, #tpu.memory_space<vmem>>, vector<16x128xf32>
      tpu.vector_store %arg19[%c0_71, %c0_72], %155 {strides = array<i32>} : memref<16x128xf32, #tpu.memory_space<vmem>>, vector<16x128xf32>,
      %161 = vector.shape_cast %155 : vector<16x128xf32> to vector<2x8x128xf32>
      %162 = vector.extract_strided_slice %161 {offsets = [0, 0, 0], sizes = [2, 1, 128], strides = [1, 1, 1]} : vector<2x8x128xf32> to vector<2x1x128xf32>
      %163 = vector.shape_cast %162 : vector<2x1x128xf32> to vector<2x128xf32>
      %164 = arith.truncf %163 : vector<2x128xf32> to vector<2x128xbf16>
      %c0_73 = arith.constant 0 : index
      %c0_74 = arith.constant 0 : index
      %165 = vector.load %arg17[%c0_73, %c0_74] : memref<128x128xbf16, #tpu.memory_space<vmem>>, vector<128x128xbf16>
      %cst_75 = arith.constant dense<0.000000e+00> : vector<2x128xf32>
      %166 = tpu.matmul %164, %165, %cst_75 {dimension_numbers = #tpu.dot_dimension_numbers<[1], [0], [0], [1], [0, 0, 1, 1], [], []>} : vector<2x128xbf16>, vector<128x128xbf16>, vector<2x128xf32> -> vector<2x128xf32>
      %c0_76 = arith.constant 0 : index
      %c0_77 = arith.constant 0 : index
      %167 = vector.load %arg18[%c0_76, %c0_77] : memref<1x128xf32, #tpu.memory_space<vmem>>, vector<1x128xf32>
      %168 = vector.broadcast %167 : vector<1x128xf32> to vector<2x128xf32>
      %169 = arith.addf %166, %168 : vector<2x128xf32>
      %170 = math.tanh %169 : vector<2x128xf32>
      %c0_78 = arith.constant 0 : index
      %c0_79 = arith.constant 0 : index
      %171 = vector.load %arg20[%c0_78, %c0_79] : memref<2x128xf32, #tpu.memory_space<vmem>>, vector<2x128xf32>
      tpu.vector_store %arg20[%c0_78, %c0_79], %170 {strides = array<i32>} : memref<2x128xf32, #tpu.memory_space<vmem>>, vector<2x128xf32>,
    } else {
    }
    return
  }
  func.func @transform_0(%arg0: i32) -> (i32, i32) {
    %c0_i32 = arith.constant 0 : i32
    %c0_i32_0 = arith.constant 0 : i32
    %c0_i32_1 = arith.constant 0 : i32
    return %c0_i32, %c0_i32_0 : i32, i32
  }
  func.func @transform_1(%arg0: i32) -> (i32, i32) {
    %c0_i32 = arith.constant 0 : i32
    %c0_i32_0 = arith.constant 0 : i32
    %c0_i32_1 = arith.constant 0 : i32
    return %c0_i32, %c0_i32_0 : i32, i32
  }
  func.func @transform_2(%arg0: i32) -> (i32, i32) {
    %c0_i32 = arith.constant 0 : i32
    %c0_i32_0 = arith.constant 0 : i32
    %c0_i32_1 = arith.constant 0 : i32
    return %c0_i32, %c0_i32_0 : i32, i32
  }
  func.func @transform_3(%arg0: i32) -> (i32, i32) {
    %c0_i32 = arith.constant 0 : i32
    %c0_i32_0 = arith.constant 0 : i32
    %c0_i32_1 = arith.constant 0 : i32
    return %c0_i32, %c0_i32_0 : i32, i32
  }
  func.func @transform_4(%arg0: i32) -> (i32, i32, i32) {
    %c0_i32 = arith.constant 0 : i32
    %c0_i32_0 = arith.constant 0 : i32
    %c0_i32_1 = arith.constant 0 : i32
    return %arg0, %c0_i32, %c0_i32_0 : i32, i32, i32
  }
  func.func @transform_5(%arg0: i32) -> (i32, i32, i32) {
    %c0_i32 = arith.constant 0 : i32
    %c0_i32_0 = arith.constant 0 : i32
    %c0_i32_1 = arith.constant 0 : i32
    return %arg0, %c0_i32, %c0_i32_0 : i32, i32, i32
  }
  func.func @transform_6(%arg0: i32) -> (i32, i32, i32) {
    %c0_i32 = arith.constant 0 : i32
    %c0_i32_0 = arith.constant 0 : i32
    %c0_i32_1 = arith.constant 0 : i32
    return %arg0, %c0_i32, %c0_i32_0 : i32, i32, i32
  }
  func.func @transform_7(%arg0: i32) -> (i32, i32, i32) {
    %c0_i32 = arith.constant 0 : i32
    %c0_i32_0 = arith.constant 0 : i32
    %c0_i32_1 = arith.constant 0 : i32
    return %arg0, %c0_i32, %c0_i32_0 : i32, i32, i32
  }
  func.func @transform_8(%arg0: i32) -> (i32, i32, i32) {
    %c0_i32 = arith.constant 0 : i32
    %c0_i32_0 = arith.constant 0 : i32
    %c0_i32_1 = arith.constant 0 : i32
    return %arg0, %c0_i32, %c0_i32_0 : i32, i32, i32
  }
  func.func @transform_9(%arg0: i32) -> (i32, i32, i32) {
    %c0_i32 = arith.constant 0 : i32
    %c0_i32_0 = arith.constant 0 : i32
    %c0_i32_1 = arith.constant 0 : i32
    return %arg0, %c0_i32, %c0_i32_0 : i32, i32, i32
  }
  func.func @transform_10(%arg0: i32) -> (i32, i32, i32) {
    %c0_i32 = arith.constant 0 : i32
    %c0_i32_0 = arith.constant 0 : i32
    %c0_i32_1 = arith.constant 0 : i32
    return %arg0, %c0_i32, %c0_i32_0 : i32, i32, i32
  }
  func.func @transform_11(%arg0: i32) -> (i32, i32, i32) {
    %c0_i32 = arith.constant 0 : i32
    %c0_i32_0 = arith.constant 0 : i32
    %c0_i32_1 = arith.constant 0 : i32
    return %arg0, %c0_i32, %c0_i32_0 : i32, i32, i32
  }
  func.func @transform_12(%arg0: i32) -> (i32, i32, i32) {
    %c0_i32 = arith.constant 0 : i32
    %c0_i32_0 = arith.constant 0 : i32
    %c0_i32_1 = arith.constant 0 : i32
    return %arg0, %c0_i32, %c0_i32_0 : i32, i32, i32
  }
  func.func @transform_13(%arg0: i32) -> (i32, i32, i32) {
    %c0_i32 = arith.constant 0 : i32
    %c0_i32_0 = arith.constant 0 : i32
    %c0_i32_1 = arith.constant 0 : i32
    return %arg0, %c0_i32, %c0_i32_0 : i32, i32, i32
  }
  func.func @transform_14(%arg0: i32) -> (i32, i32, i32) {
    %c0_i32 = arith.constant 0 : i32
    %c0_i32_0 = arith.constant 0 : i32
    %c0_i32_1 = arith.constant 0 : i32
    return %arg0, %c0_i32, %c0_i32_0 : i32, i32, i32
  }
  func.func @transform_15(%arg0: i32) -> (i32, i32, i32) {
    %c0_i32 = arith.constant 0 : i32
    %c0_i32_0 = arith.constant 0 : i32
    %c0_i32_1 = arith.constant 0 : i32
    return %arg0, %c0_i32, %c0_i32_0 : i32, i32, i32
  }
  func.func @transform_16(%arg0: i32) -> (i32, i32) {
    %c0_i32 = arith.constant 0 : i32
    %c0_i32_0 = arith.constant 0 : i32
    %c0_i32_1 = arith.constant 0 : i32
    return %c0_i32, %c0_i32_0 : i32, i32
  }
  func.func @transform_17(%arg0: i32) -> (i32, i32) {
    %c0_i32 = arith.constant 0 : i32
    %c0_i32_0 = arith.constant 0 : i32
    %c0_i32_1 = arith.constant 0 : i32
    return %c0_i32, %c0_i32_0 : i32, i32
  }
  func.func @transform_18(%arg0: i32) -> (i32, i32) {
    %c0_i32 = arith.constant 0 : i32
    %c0_i32_0 = arith.constant 0 : i32
    %c0_i32_1 = arith.constant 0 : i32
    return %c0_i32, %c0_i32_0 : i32, i32
  }
  func.func @transform_19(%arg0: i32) -> (i32, i32) {
    %c0_i32 = arith.constant 0 : i32
    %c0_i32_0 = arith.constant 0 : i32
    %c0_i32_1 = arith.constant 0 : i32
    return %c0_i32, %c0_i32_0 : i32, i32
  }
}

</mosaic_0001>

<llo_original>
// kernel: base_encoder_forward.1
$region0: #{base_encoder_forward.1}
  #allocation0 [shape = 'u32[]', space=smem, size = 0x4, offset = 0x4, fixed_abs, tag = 'smem constant byte address 0x4 - core index']
  #allocation1 [shape = 'u32[72,128]{1,0:T(1,128)}', space=vmem, size = 0x9000, scoped, tag = 'internal scratch']
  #allocation2 [shape = 'f32[16,128]{1,0:T(8,128)}', space=vmem, size = 0x2000, scoped, tag = 'scratch operand']
  %s0 = inlined_call_operand.vmem [shape: f32[16,128], index: 0, kind: input, shape index: {}]
  %s1 = inlined_call_operand.vmem [shape: f32[1,128], index: 1, kind: input, shape index: {}]
  %s2 = inlined_call_operand.vmem [shape: f32[1,128], index: 2, kind: input, shape index: {}]
  %s3 = inlined_call_operand.vmem [shape: f32[16,16], index: 3, kind: input, shape index: {}]
  %s4 = inlined_call_operand.hbm [shape: bf16[2,128,384], index: 4, kind: input, shape index: {}]
  %s5 = inlined_call_operand.vmem [shape: f32[2,1,384], index: 5, kind: input, shape index: {}]
  %s6 = inlined_call_operand.vmem [shape: bf16[2,128,128], index: 6, kind: input, shape index: {}]
  %s7 = inlined_call_operand.vmem [shape: f32[2,1,128], index: 7, kind: input, shape index: {}]
  %s8 = inlined_call_operand.vmem [shape: f32[2,1,128], index: 8, kind: input, shape index: {}]
  %s9 = inlined_call_operand.vmem [shape: f32[2,1,128], index: 9, kind: input, shape index: {}]
  %s10 = inlined_call_operand.hbm [shape: bf16[2,128,256], index: 10, kind: input, shape index: {}]
  %s11 = inlined_call_operand.vmem [shape: f32[2,1,256], index: 11, kind: input, shape index: {}]
  %s12 = inlined_call_operand.hbm [shape: bf16[2,256,128], index: 12, kind: input, shape index: {}]
  %s13 = inlined_call_operand.vmem [shape: f32[2,1,128], index: 13, kind: input, shape index: {}]
  %s14 = inlined_call_operand.vmem [shape: f32[2,1,128], index: 14, kind: input, shape index: {}]
  %s15 = inlined_call_operand.vmem [shape: f32[2,1,128], index: 15, kind: input, shape index: {}]
  %s16 = inlined_call_operand.vmem [shape: bf16[128,128], index: 16, kind: input, shape index: {}]
  %s17 = inlined_call_operand.vmem [shape: f32[1,128], index: 17, kind: input, shape index: {}]
  %s18 = inlined_call_operand.hbm [shape: f32[16,128], index: 18, kind: output, shape index: {0}]
  %s19 = inlined_call_operand.hbm [shape: f32[2,128], index: 19, kind: output, shape index: {1}]
  %20 = xla_tuple %s18, %s19
  %s21 = sld [smem:[#allocation0]]
  $region133: #{base_encoder_forward.1} parent=0
    _
  %s23 = ssub.s32 1, %s21
  %s24 = scalar_select 0, %s23, %s21
  $region1: #{base_encoder_forward.1} parent=0
    #allocation3 [shape = 'u8[196608]{0}', space=vmem, size = 0x30000, scoped, tag = 'input window, operand 4']
    #allocation4 [shape = 's32[2]{0}', space=sflag, size = 0x8, scoped, tag = 'scoped memory for base_encoder_forward.1']
    #allocation5 [shape = 's32[2]{0}', space=sflag, size = 0x8, scoped, tag = 'scoped memory for base_encoder_forward.1']
    #allocation6 [shape = 'u8[131072]{0}', space=vmem, size = 0x20000, scoped, tag = 'input window, operand 10']
    #allocation7 [shape = 's32[2]{0}', space=sflag, size = 0x8, scoped, tag = 'scoped memory for base_encoder_forward.1']
    #allocation8 [shape = 'u8[131072]{0}', space=vmem, size = 0x20000, scoped, tag = 'input window, operand 12']
    #allocation9 [shape = 'u8[8192]{0}', space=vmem, size = 0x2000, scoped, tag = 'output window, operand 0, single buffered']
    #allocation10 [shape = 'u8[1024]{0}', space=vmem, size = 0x400, scoped, tag = 'output window, operand 1, single buffered']
    #allocation11 [shape = 's32[1]{0}', space=sflag, size = 0x4, scoped, tag = 'scoped memory for base_encoder_forward.1']
    %25 = vsyncpa [#allocation4], 0
    %s26 = scalar_lea.sflag [#allocation4], 1
    %27 = vsyncpa %s26, 0
    %28 = vsyncpa [#allocation7], 0
    %s29 = scalar_lea.sflag [#allocation7], 1
    %30 = vsyncpa %s29, 0
    %31 = vsyncpa [#allocation5], 0
    %32 = vsyncpa [#allocation11], 0
    loop: start=0, step=1, limit=4
    $region2: #{base_encoder_forward.1} parent=1 // loop_pre_header
      _
    $region3: #{base_encoder_forward.1} parent=1 // loop_header
      %s34 = sphi 0, %s38
      %p35 = scmp.ge.s32.totalorder %s34, 4
      %s42 = sphi 0, %s42
      %s44 = sphi 0, %s42
      %s45 = sphi 0, %s44
      %s59 = sphi 0, %s45
      %s63 = sphi 0, %s63
      %s65 = sphi 0, %s63
      %s66 = sphi 0, %s65
      %s80 = sphi 0, %s66
      %s84 = sphi 0, %s84
      %s86 = sphi 0, %s84
      %s87 = sphi 0, %s86
      %s101 = sphi 0, %s87
      %s105 = sphi 0, %s105
      %s107 = sphi 0, %s105
      %s108 = sphi 0, %s107
      %s122 = sphi 0, %s108
      %s128 = sphi 0, %s130
      %s131 = sphi 0, %s128
      %s132 = sphi 0, %s131
      %s148 = sphi 0, %s132
      %s154 = sphi 0, %s156
      %s157 = sphi 0, %s154
      %s158 = sphi 0, %s157
      %s174 = sphi 0, %s158
      %s180 = sphi 0, %s182
      %s183 = sphi 0, %s180
      %s184 = sphi 0, %s183
      %s200 = sphi 0, %s184
      %s206 = sphi 0, %s208
      %s209 = sphi 0, %s206
      %s210 = sphi 0, %s209
      %s226 = sphi 0, %s210
      %s232 = sphi 0, %s234
      %s235 = sphi 0, %s232
      %s236 = sphi 0, %s235
      %s252 = sphi 0, %s236
      %s258 = sphi 0, %s260
      %s261 = sphi 0, %s258
      %s262 = sphi 0, %s261
      %s278 = sphi 0, %s262
      %s284 = sphi 0, %s286
      %s287 = sphi 0, %s284
      %s288 = sphi 0, %s287
      %s304 = sphi 0, %s288
      %s310 = sphi 0, %s312
      %s313 = sphi 0, %s310
      %s314 = sphi 0, %s313
      %s330 = sphi 0, %s314
      %s336 = sphi 0, %s338
      %s339 = sphi 0, %s336
      %s340 = sphi 0, %s339
      %s356 = sphi 0, %s340
      %s362 = sphi 0, %s364
      %s365 = sphi 0, %s362
      %s366 = sphi 0, %s365
      %s382 = sphi 0, %s366
      %s388 = sphi 0, %s390
      %s391 = sphi 0, %s388
      %s392 = sphi 0, %s391
      %s408 = sphi 0, %s392
      %s414 = sphi 0, %s416
      %s417 = sphi 0, %s414
      %s418 = sphi 0, %s417
      %s434 = sphi 0, %s418
      %s438 = sphi 0, %s438
      %s440 = sphi 0, %s438
      %s441 = sphi 0, %s440
      %s455 = sphi 0, %s441
      %s459 = sphi 0, %s459
      %s461 = sphi 0, %s459
      %s462 = sphi 0, %s461
      %s476 = sphi 0, %s462
      %s480 = sphi 0, %s480
      %s482 = sphi 0, %s480
      %s483 = sphi 0, %s482
      %s497 = sphi 0, %s483
      %s501 = sphi 0, %s501
      %s503 = sphi 0, %s501
      %s504 = sphi 0, %s503
      %s518 = sphi 0, %s504
    $region4: #{base_encoder_forward.1} parent=1 // loop_header_branch
      %37 = sbr.rel (%p35) target = $region8
    $region5: #{base_encoder_forward.1} parent=1 // loop_body
      %s39 = ssub.s32 %s34, 1
      %s40 = ssub.s32 %s34, 2
      %s41 = sadd.s32 %s34, 1
      %s43 = sadd.s32 %s42, 1
      %p46 = scmp.eq.s32.totalorder %s34, 1
      %p47 = scmp.ne.s32.totalorder %s42, %s44
      %p48 = scmp.eq.s32.totalorder %s34, 0
      %p49 = por %p47, %p48
      %p50 = scmp.ne.s32.totalorder %s42, %s44
      %p51 = scmp.eq.s32.totalorder %s39, 1
      %p52 = por %p50, %p51
      %p53 = scmp.ne.s32.totalorder %s44, %s45
      %p54 = scmp.eq.s32.totalorder %s39, 0
      %p55 = por %p53, %p54
      %p56 = scmp.ne.s32.totalorder %s44, %s45
      %p57 = scmp.eq.s32.totalorder %s40, 1
      %p58 = por %p56, %p57
      %p60 = scmp.ne.s32.totalorder %s45, %s59
      %p61 = scmp.eq.s32.totalorder %s40, 0
      %p62 = por %p60, %p61
      %s64 = sadd.s32 %s63, 1
      %p67 = scmp.eq.s32.totalorder %s34, 1
      %p68 = scmp.ne.s32.totalorder %s63, %s65
      %p69 = scmp.eq.s32.totalorder %s34, 0
      %p70 = por %p68, %p69
      %p71 = scmp.ne.s32.totalorder %s63, %s65
      %p72 = scmp.eq.s32.totalorder %s39, 1
      %p73 = por %p71, %p72
      %p74 = scmp.ne.s32.totalorder %s65, %s66
      %p75 = scmp.eq.s32.totalorder %s39, 0
      %p76 = por %p74, %p75
      %p77 = scmp.ne.s32.totalorder %s65, %s66
      %p78 = scmp.eq.s32.totalorder %s40, 1
      %p79 = por %p77, %p78
      %p81 = scmp.ne.s32.totalorder %s66, %s80
      %p82 = scmp.eq.s32.totalorder %s40, 0
      %p83 = por %p81, %p82
      %s85 = sadd.s32 %s84, 1
      %p88 = scmp.eq.s32.totalorder %s34, 1
      %p89 = scmp.ne.s32.totalorder %s84, %s86
      %p90 = scmp.eq.s32.totalorder %s34, 0
      %p91 = por %p89, %p90
      %p92 = scmp.ne.s32.totalorder %s84, %s86
      %p93 = scmp.eq.s32.totalorder %s39, 1
      %p94 = por %p92, %p93
      %p95 = scmp.ne.s32.totalorder %s86, %s87
      %p96 = scmp.eq.s32.totalorder %s39, 0
      %p97 = por %p95, %p96
      %p98 = scmp.ne.s32.totalorder %s86, %s87
      %p99 = scmp.eq.s32.totalorder %s40, 1
      %p100 = por %p98, %p99
      %p102 = scmp.ne.s32.totalorder %s87, %s101
      %p103 = scmp.eq.s32.totalorder %s40, 0
      %p104 = por %p102, %p103
      %s106 = sadd.s32 %s105, 1
      %p109 = scmp.eq.s32.totalorder %s34, 1
      %p110 = scmp.ne.s32.totalorder %s105, %s107
      %p111 = scmp.eq.s32.totalorder %s34, 0
      %p112 = por %p110, %p111
      %p113 = scmp.ne.s32.totalorder %s105, %s107
      %p114 = scmp.eq.s32.totalorder %s39, 1
      %p115 = por %p113, %p114
      %p116 = scmp.ne.s32.totalorder %s107, %s108
      %p117 = scmp.eq.s32.totalorder %s39, 0
      %p118 = por %p116, %p117
      %p119 = scmp.ne.s32.totalorder %s107, %s108
      %p120 = scmp.eq.s32.totalorder %s40, 1
      %p121 = por %p119, %p120
      %p123 = scmp.ne.s32.totalorder %s108, %s122
      %p124 = scmp.eq.s32.totalorder %s40, 0
      %p125 = por %p123, %p124
      %s126 = ssub.s32 %s34, %s41
      %p127 = scmp.eq.s32.totalorder %s126, 0
      %s129 = sadd.s32 %s128, 1
      %s130 = scalar_select %p127, %s128, %s129
      %p133 = pneg %p127
      %p134 = scmp.eq.s32.totalorder %s34, 1
      %p135 = por %p133, %p134
      %p136 = scmp.ne.s32.totalorder %s128, %s131
      %p137 = scmp.eq.s32.totalorder %s34, 0
      %p138 = por %p136, %p137
      %p139 = scmp.ne.s32.totalorder %s128, %s131
      %p140 = scmp.eq.s32.totalorder %s39, 1
      %p141 = por %p139, %p140
      %p142 = scmp.ne.s32.totalorder %s131, %s132
      %p143 = scmp.eq.s32.totalorder %s39, 0
      %p144 = por %p142, %p143
      %p145 = scmp.ne.s32.totalorder %s131, %s132
      %p146 = scmp.eq.s32.totalorder %s40, 1
      %p147 = por %p145, %p146
      %p149 = scmp.ne.s32.totalorder %s132, %s148
      %p150 = scmp.eq.s32.totalorder %s40, 0
      %p151 = por %p149, %p150
      %s152 = ssub.s32 %s34, %s41
      %p153 = scmp.eq.s32.totalorder %s152, 0
      %s155 = sadd.s32 %s154, 1
      %s156 = scalar_select %p153, %s154, %s155
      %p159 = pneg %p153
      %p160 = scmp.eq.s32.totalorder %s34, 1
      %p161 = por %p159, %p160
      %p162 = scmp.ne.s32.totalorder %s154, %s157
      %p163 = scmp.eq.s32.totalorder %s34, 0
      %p164 = por %p162, %p163
      %p165 = scmp.ne.s32.totalorder %s154, %s157
      %p166 = scmp.eq.s32.totalorder %s39, 1
      %p167 = por %p165, %p166
      %p168 = scmp.ne.s32.totalorder %s157, %s158
      %p169 = scmp.eq.s32.totalorder %s39, 0
      %p170 = por %p168, %p169
      %p171 = scmp.ne.s32.totalorder %s157, %s158
      %p172 = scmp.eq.s32.totalorder %s40, 1
      %p173 = por %p171, %p172
      %p175 = scmp.ne.s32.totalorder %s158, %s174
      %p176 = scmp.eq.s32.totalorder %s40, 0
      %p177 = por %p175, %p176
      %s178 = ssub.s32 %s34, %s41
      %p179 = scmp.eq.s32.totalorder %s178, 0
      %s181 = sadd.s32 %s180, 1
      %s182 = scalar_select %p179, %s180, %s181
      %p185 = pneg %p179
      %p186 = scmp.eq.s32.totalorder %s34, 1
      %p187 = por %p185, %p186
      %p188 = scmp.ne.s32.totalorder %s180, %s183
      %p189 = scmp.eq.s32.totalorder %s34, 0
      %p190 = por %p188, %p189
      %p191 = scmp.ne.s32.totalorder %s180, %s183
      %p192 = scmp.eq.s32.totalorder %s39, 1
      %p193 = por %p191, %p192
      %p194 = scmp.ne.s32.totalorder %s183, %s184
      %p195 = scmp.eq.s32.totalorder %s39, 0
      %p196 = por %p194, %p195
      %p197 = scmp.ne.s32.totalorder %s183, %s184
      %p198 = scmp.eq.s32.totalorder %s40, 1
      %p199 = por %p197, %p198
      %p201 = scmp.ne.s32.totalorder %s184, %s200
      %p202 = scmp.eq.s32.totalorder %s40, 0
      %p203 = por %p201, %p202
      %s204 = ssub.s32 %s34, %s41
      %p205 = scmp.eq.s32.totalorder %s204, 0
      %s207 = sadd.s32 %s206, 1
      %s208 = scalar_select %p205, %s206, %s207
      %p211 = pneg %p205
      %p212 = scmp.eq.s32.totalorder %s34, 1
      %p213 = por %p211, %p212
      %p214 = scmp.ne.s32.totalorder %s206, %s209
      %p215 = scmp.eq.s32.totalorder %s34, 0
      %p216 = por %p214, %p215
      %p217 = scmp.ne.s32.totalorder %s206, %s209
      %p218 = scmp.eq.s32.totalorder %s39, 1
      %p219 = por %p217, %p218
      %p220 = scmp.ne.s32.totalorder %s209, %s210
      %p221 = scmp.eq.s32.totalorder %s39, 0
      %p222 = por %p220, %p221
      %p223 = scmp.ne.s32.totalorder %s209, %s210
      %p224 = scmp.eq.s32.totalorder %s40, 1
      %p225 = por %p223, %p224
      %p227 = scmp.ne.s32.totalorder %s210, %s226
      %p228 = scmp.eq.s32.totalorder %s40, 0
      %p229 = por %p227, %p228
      %s230 = ssub.s32 %s34, %s41
      %p231 = scmp.eq.s32.totalorder %s230, 0
      %s233 = sadd.s32 %s232, 1
      %s234 = scalar_select %p231, %s232, %s233
      %p237 = pneg %p231
      %p238 = scmp.eq.s32.totalorder %s34, 1
      %p239 = por %p237, %p238
      %p240 = scmp.ne.s32.totalorder %s232, %s235
      %p241 = scmp.eq.s32.totalorder %s34, 0
      %p242 = por %p240, %p241
      %p243 = scmp.ne.s32.totalorder %s232, %s235
      %p244 = scmp.eq.s32.totalorder %s39, 1
      %p245 = por %p243, %p244
      %p246 = scmp.ne.s32.totalorder %s235, %s236
      %p247 = scmp.eq.s32.totalorder %s39, 0
      %p248 = por %p246, %p247
      %p249 = scmp.ne.s32.totalorder %s235, %s236
      %p250 = scmp.eq.s32.totalorder %s40, 1
      %p251 = por %p249, %p250
      %p253 = scmp.ne.s32.totalorder %s236, %s252
      %p254 = scmp.eq.s32.totalorder %s40, 0
      %p255 = por %p253, %p254
      %s256 = ssub.s32 %s34, %s41
      %p257 = scmp.eq.s32.totalorder %s256, 0
      %s259 = sadd.s32 %s258, 1
      %s260 = scalar_select %p257, %s258, %s259
      %p263 = pneg %p257
      %p264 = scmp.eq.s32.totalorder %s34, 1
      %p265 = por %p263, %p264
      %p266 = scmp.ne.s32.totalorder %s258, %s261
      %p267 = scmp.eq.s32.totalorder %s34, 0
      %p268 = por %p266, %p267
      %p269 = scmp.ne.s32.totalorder %s258, %s261
      %p270 = scmp.eq.s32.totalorder %s39, 1
      %p271 = por %p269, %p270
      %p272 = scmp.ne.s32.totalorder %s261, %s262
      %p273 = scmp.eq.s32.totalorder %s39, 0
      %p274 = por %p272, %p273
      %p275 = scmp.ne.s32.totalorder %s261, %s262
      %p276 = scmp.eq.s32.totalorder %s40, 1
      %p277 = por %p275, %p276
      %p279 = scmp.ne.s32.totalorder %s262, %s278
      %p280 = scmp.eq.s32.totalorder %s40, 0
      %p281 = por %p279, %p280
      %s282 = ssub.s32 %s34, %s41
      %p283 = scmp.eq.s32.totalorder %s282, 0
      %s285 = sadd.s32 %s284, 1
      %s286 = scalar_select %p283, %s284, %s285
      %p289 = pneg %p283
      %p290 = scmp.eq.s32.totalorder %s34, 1
      %p291 = por %p289, %p290
      %p292 = scmp.ne.s32.totalorder %s284, %s287
      %p293 = scmp.eq.s32.totalorder %s34, 0
      %p294 = por %p292, %p293
      %p295 = scmp.ne.s32.totalorder %s284, %s287
      %p296 = scmp.eq.s32.totalorder %s39, 1
      %p297 = por %p295, %p296
      %p298 = scmp.ne.s32.totalorder %s287, %s288
      %p299 = scmp.eq.s32.totalorder %s39, 0
      %p300 = por %p298, %p299
      %p301 = scmp.ne.s32.totalorder %s287, %s288
      %p302 = scmp.eq.s32.totalorder %s40, 1
      %p303 = por %p301, %p302
      %p305 = scmp.ne.s32.totalorder %s288, %s304
      %p306 = scmp.eq.s32.totalorder %s40, 0
      %p307 = por %p305, %p306
      %s308 = ssub.s32 %s34, %s41
      %p309 = scmp.eq.s32.totalorder %s308, 0
      %s311 = sadd.s32 %s310, 1
      %s312 = scalar_select %p309, %s310, %s311
      %p315 = pneg %p309
      %p316 = scmp.eq.s32.totalorder %s34, 1
      %p317 = por %p315, %p316
      %p318 = scmp.ne.s32.totalorder %s310, %s313
      %p319 = scmp.eq.s32.totalorder %s34, 0
      %p320 = por %p318, %p319
      %p321 = scmp.ne.s32.totalorder %s310, %s313
      %p322 = scmp.eq.s32.totalorder %s39, 1
      %p323 = por %p321, %p322
      %p324 = scmp.ne.s32.totalorder %s313, %s314
      %p325 = scmp.eq.s32.totalorder %s39, 0
      %p326 = por %p324, %p325
      %p327 = scmp.ne.s32.totalorder %s313, %s314
      %p328 = scmp.eq.s32.totalorder %s40, 1
      %p329 = por %p327, %p328
      %p331 = scmp.ne.s32.totalorder %s314, %s330
      %p332 = scmp.eq.s32.totalorder %s40, 0
      %p333 = por %p331, %p332
      %s334 = ssub.s32 %s34, %s41
      %p335 = scmp.eq.s32.totalorder %s334, 0
      %s337 = sadd.s32 %s336, 1
      %s338 = scalar_select %p335, %s336, %s337
      %p341 = pneg %p335
      %p342 = scmp.eq.s32.totalorder %s34, 1
      %p343 = por %p341, %p342
      %p344 = scmp.ne.s32.totalorder %s336, %s339
      %p345 = scmp.eq.s32.totalorder %s34, 0
      %p346 = por %p344, %p345
      %p347 = scmp.ne.s32.totalorder %s336, %s339
      %p348 = scmp.eq.s32.totalorder %s39, 1
      %p349 = por %p347, %p348
      %p350 = scmp.ne.s32.totalorder %s339, %s340
      %p351 = scmp.eq.s32.totalorder %s39, 0
      %p352 = por %p350, %p351
      %p353 = scmp.ne.s32.totalorder %s339, %s340
      %p354 = scmp.eq.s32.totalorder %s40, 1
      %p355 = por %p353, %p354
      %p357 = scmp.ne.s32.totalorder %s340, %s356
      %p358 = scmp.eq.s32.totalorder %s40, 0
      %p359 = por %p357, %p358
      %s360 = ssub.s32 %s34, %s41
      %p361 = scmp.eq.s32.totalorder %s360, 0
      %s363 = sadd.s32 %s362, 1
      %s364 = scalar_select %p361, %s362, %s363
      %p367 = pneg %p361
      %p368 = scmp.eq.s32.totalorder %s34, 1
      %p369 = por %p367, %p368
      %p370 = scmp.ne.s32.totalorder %s362, %s365
      %p371 = scmp.eq.s32.totalorder %s34, 0
      %p372 = por %p370, %p371
      %p373 = scmp.ne.s32.totalorder %s362, %s365
      %p374 = scmp.eq.s32.totalorder %s39, 1
      %p375 = por %p373, %p374
      %p376 = scmp.ne.s32.totalorder %s365, %s366
      %p377 = scmp.eq.s32.totalorder %s39, 0
      %p378 = por %p376, %p377
      %p379 = scmp.ne.s32.totalorder %s365, %s366
      %p380 = scmp.eq.s32.totalorder %s40, 1
      %p381 = por %p379, %p380
      %p383 = scmp.ne.s32.totalorder %s366, %s382
      %p384 = scmp.eq.s32.totalorder %s40, 0
      %p385 = por %p383, %p384
      %s386 = ssub.s32 %s34, %s41
      %p387 = scmp.eq.s32.totalorder %s386, 0
      %s389 = sadd.s32 %s388, 1
      %s390 = scalar_select %p387, %s388, %s389
      %p393 = pneg %p387
      %p394 = scmp.eq.s32.totalorder %s34, 1
      %p395 = por %p393, %p394
      %p396 = scmp.ne.s32.totalorder %s388, %s391
      %p397 = scmp.eq.s32.totalorder %s34, 0
      %p398 = por %p396, %p397
      %p399 = scmp.ne.s32.totalorder %s388, %s391
      %p400 = scmp.eq.s32.totalorder %s39, 1
      %p401 = por %p399, %p400
      %p402 = scmp.ne.s32.totalorder %s391, %s392
      %p403 = scmp.eq.s32.totalorder %s39, 0
      %p404 = por %p402, %p403
      %p405 = scmp.ne.s32.totalorder %s391, %s392
      %p406 = scmp.eq.s32.totalorder %s40, 1
      %p407 = por %p405, %p406
      %p409 = scmp.ne.s32.totalorder %s392, %s408
      %p410 = scmp.eq.s32.totalorder %s40, 0
      %p411 = por %p409, %p410
      %s412 = ssub.s32 %s34, %s41
      %p413 = scmp.eq.s32.totalorder %s412, 0
      %s415 = sadd.s32 %s414, 1
      %s416 = scalar_select %p413, %s414, %s415
      %p419 = pneg %p413
      %p420 = scmp.eq.s32.totalorder %s34, 1
      %p421 = por %p419, %p420
      %p422 = scmp.ne.s32.totalorder %s414, %s417
      %p423 = scmp.eq.s32.totalorder %s34, 0
      %p424 = por %p422, %p423
      %p425 = scmp.ne.s32.totalorder %s414, %s417
      %p426 = scmp.eq.s32.totalorder %s39, 1
      %p427 = por %p425, %p426
      %p428 = scmp.ne.s32.totalorder %s417, %s418
      %p429 = scmp.eq.s32.totalorder %s39, 0
      %p430 = por %p428, %p429
      %p431 = scmp.ne.s32.totalorder %s417, %s418
      %p432 = scmp.eq.s32.totalorder %s40, 1
      %p433 = por %p431, %p432
      %p435 = scmp.ne.s32.totalorder %s418, %s434
      %p436 = scmp.eq.s32.totalorder %s40, 0
      %p437 = por %p435, %p436
      %s439 = sadd.s32 %s438, 1
      %p442 = scmp.eq.s32.totalorder %s34, 1
      %p443 = scmp.ne.s32.totalorder %s438, %s440
      %p444 = scmp.eq.s32.totalorder %s34, 0
      %p445 = por %p443, %p444
      %p446 = scmp.ne.s32.totalorder %s438, %s440
      %p447 = scmp.eq.s32.totalorder %s39, 1
      %p448 = por %p446, %p447
      %p449 = scmp.ne.s32.totalorder %s440, %s441
      %p450 = scmp.eq.s32.totalorder %s39, 0
      %p451 = por %p449, %p450
      %p452 = scmp.ne.s32.totalorder %s440, %s441
      %p453 = scmp.eq.s32.totalorder %s40, 1
      %p454 = por %p452, %p453
      %p456 = scmp.ne.s32.totalorder %s441, %s455
      %p457 = scmp.eq.s32.totalorder %s40, 0
      %p458 = por %p456, %p457
      %s460 = sadd.s32 %s459, 1
      %p463 = scmp.eq.s32.totalorder %s34, 1
      %p464 = scmp.ne.s32.totalorder %s459, %s461
      %p465 = scmp.eq.s32.totalorder %s34, 0
      %p466 = por %p464, %p465
      %p467 = scmp.ne.s32.totalorder %s459, %s461
      %p468 = scmp.eq.s32.totalorder %s39, 1
      %p469 = por %p467, %p468
      %p470 = scmp.ne.s32.totalorder %s461, %s462
      %p471 = scmp.eq.s32.totalorder %s39, 0
      %p472 = por %p470, %p471
      %p473 = scmp.ne.s32.totalorder %s461, %s462
      %p474 = scmp.eq.s32.totalorder %s40, 1
      %p475 = por %p473, %p474
      %p477 = scmp.ne.s32.totalorder %s462, %s476
      %p478 = scmp.eq.s32.totalorder %s40, 0
      %p479 = por %p477, %p478
      %s481 = sadd.s32 %s480, 1
      %p484 = scmp.eq.s32.totalorder %s34, 1
      %p485 = scmp.ne.s32.totalorder %s480, %s482
      %p486 = scmp.eq.s32.totalorder %s34, 0
      %p487 = por %p485, %p486
      %p488 = scmp.ne.s32.totalorder %s480, %s482
      %p489 = scmp.eq.s32.totalorder %s39, 1
      %p490 = por %p488, %p489
      %p491 = scmp.ne.s32.totalorder %s482, %s483
      %p492 = scmp.eq.s32.totalorder %s39, 0
      %p493 = por %p491, %p492
      %p494 = scmp.ne.s32.totalorder %s482, %s483
      %p495 = scmp.eq.s32.totalorder %s40, 1
      %p496 = por %p494, %p495
      %p498 = scmp.ne.s32.totalorder %s483, %s497
      %p499 = scmp.eq.s32.totalorder %s40, 0
      %p500 = por %p498, %p499
      %s502 = sadd.s32 %s501, 1
      %p505 = scmp.eq.s32.totalorder %s34, 1
      %p506 = scmp.ne.s32.totalorder %s501, %s503
      %p507 = scmp.eq.s32.totalorder %s34, 0
      %p508 = por %p506, %p507
      %p509 = scmp.ne.s32.totalorder %s501, %s503
      %p510 = scmp.eq.s32.totalorder %s39, 1
      %p511 = por %p509, %p510
      %p512 = scmp.ne.s32.totalorder %s503, %s504
      %p513 = scmp.eq.s32.totalorder %s39, 0
      %p514 = por %p512, %p513
      %p515 = scmp.ne.s32.totalorder %s503, %s504
      %p516 = scmp.eq.s32.totalorder %s40, 1
      %p517 = por %p515, %p516
      %p519 = scmp.ne.s32.totalorder %s504, %s518
      %p520 = scmp.eq.s32.totalorder %s40, 0
      %p521 = por %p519, %p520
      %p522 = scmp.le.s32.totalorder 1, %s34
      %p523 = scmp.lt.s32.totalorder %s34, 3
      %p524 = pnand %p522, %p523
      %p525 = pneg %p524
      // Predicated region
      $region9: #{base_encoder_forward.1} parent=5 // pred_check
        _
      $region10: #{base_encoder_forward.1} parent=5 // pred_check_branch
        %527 = sbr.rel (%p524) target = $region12
      $region11: #{base_encoder_forward.1} parent=5 // pred_region
        %s528 = ssub.s32 %s34, 1
        // Predicated region
        $region13: #{base_encoder_forward.1} parent=11 // pred_check
          %p529 = pneg %p55
        $region14: #{base_encoder_forward.1} parent=11 // pred_check_branch
          %531 = sbr.rel (%p529) target = $region16
        $region15: #{base_encoder_forward.1} parent=11 // pred_region
          _
        $region16: #{base_encoder_forward.1} parent=11 // pred_fallthru
          _
        // Predicated region
        $region17: #{base_encoder_forward.1} parent=11 // pred_check
          %p532 = pneg %p76
        $region18: #{base_encoder_forward.1} parent=11 // pred_check_branch
          %534 = sbr.rel (%p532) target = $region20
        $region19: #{base_encoder_forward.1} parent=11 // pred_region
          _
        $region20: #{base_encoder_forward.1} parent=11 // pred_fallthru
          _
        // Predicated region
        $region21: #{base_encoder_forward.1} parent=11 // pred_check
          %p535 = pneg %p97
        $region22: #{base_encoder_forward.1} parent=11 // pred_check_branch
          %537 = sbr.rel (%p535) target = $region24
        $region23: #{base_encoder_forward.1} parent=11 // pred_region
          _
        $region24: #{base_encoder_forward.1} parent=11 // pred_fallthru
          _
        // Predicated region
        $region25: #{base_encoder_forward.1} parent=11 // pred_check
          %p538 = pneg %p118
        $region26: #{base_encoder_forward.1} parent=11 // pred_check_branch
          %540 = sbr.rel (%p538) target = $region28
        $region27: #{base_encoder_forward.1} parent=11 // pred_region
          _
        $region28: #{base_encoder_forward.1} parent=11 // pred_fallthru
          _
        // Predicated region
        $region29: #{base_encoder_forward.1} parent=11 // pred_check
          %p541 = pneg %p451
        $region30: #{base_encoder_forward.1} parent=11 // pred_check_branch
          %543 = sbr.rel (%p541) target = $region32
        $region31: #{base_encoder_forward.1} parent=11 // pred_region
          _
        $region32: #{base_encoder_forward.1} parent=11 // pred_fallthru
          _
        // Predicated region
        $region33: #{base_encoder_forward.1} parent=11 // pred_check
          %p544 = pneg %p472
        $region34: #{base_encoder_forward.1} parent=11 // pred_check_branch
          %546 = sbr.rel (%p544) target = $region36
        $region35: #{base_encoder_forward.1} parent=11 // pred_region
          _
        $region36: #{base_encoder_forward.1} parent=11 // pred_fallthru
          _
      $region12: #{base_encoder_forward.1} parent=5 // pred_fallthru
        _
      %p547 = scmp.lt.s32.totalorder %s34, 2
      // Predicated region
      $region37: #{base_encoder_forward.1} parent=5 // pred_check
        %p548 = pneg %p547
      $region38: #{base_encoder_forward.1} parent=5 // pred_check_branch
        %550 = sbr.rel (%p548) target = $region40
      $region39: #{base_encoder_forward.1} parent=5 // pred_region
        // Predicated region
        $region41: #{base_encoder_forward.1} parent=39 // pred_check
          %p551 = pneg %p138
        $region42: #{base_encoder_forward.1} parent=39 // pred_check_branch
          %553 = sbr.rel (%p551) target = $region44
        $region43: #{base_encoder_forward.1} parent=39 // pred_region
          %s554 = sand.u32 %s128, 1
          %s555 = scalar_lea.sflag [#allocation4], %s554
          %s556 = sand.u32 %s128, 1
          %s557 = smul.addr %s556, 192
          %s558 = scalar_lea.vmem [#allocation3], %s557
          %560 = vsyncadd %s555, 0
          %s561 = smul.addr %s34, 48
          %s562 = smul.addr %s561, 4
          %s563 = scalar_lea.hbm %s4, %s562
          %s564 = sshll.u32 %s563, 4
          %s565 = int_to_ptr.hbm [resolvable:$true] %s564
          %s566 = sshll.u32 %s558, 4
          %s567 = int_to_ptr.vmem [resolvable:$true] %s566
          %572 = dma.hbm_to_vmem [thread:$0]  %s565, 3072, %s567, %s555, 192, 192, 12
        $region44: #{base_encoder_forward.1} parent=39 // pred_fallthru
          _
        // Predicated region
        $region45: #{base_encoder_forward.1} parent=39 // pred_check
          %p573 = pneg %p164
        $region46: #{base_encoder_forward.1} parent=39 // pred_check_branch
          %575 = sbr.rel (%p573) target = $region48
        $region47: #{base_encoder_forward.1} parent=39 // pred_region
          %p576 = scmp.lt.s32.totalorder %s34, 1
          %s577 = scalar_select %p576, %s34, 1
          %s578 = smul.addr %s577, 3
          %s579 = scalar_lea.vmem %s5, %s578
        $region48: #{base_encoder_forward.1} parent=39 // pred_fallthru
          _
        // Predicated region
        $region49: #{base_encoder_forward.1} parent=39 // pred_check
          %p580 = pneg %p190
        $region50: #{base_encoder_forward.1} parent=39 // pred_check_branch
          %582 = sbr.rel (%p580) target = $region52
        $region51: #{base_encoder_forward.1} parent=39 // pred_region
          %p583 = scmp.lt.s32.totalorder %s34, 1
          %s584 = scalar_select %p583, %s34, 1
          %s585 = smul.addr %s584, 16
          %s586 = smul.addr %s585, 4
          %s587 = scalar_lea.vmem %s6, %s586
        $region52: #{base_encoder_forward.1} parent=39 // pred_fallthru
          _
        // Predicated region
        $region53: #{base_encoder_forward.1} parent=39 // pred_check
          %p588 = pneg %p216
        $region54: #{base_encoder_forward.1} parent=39 // pred_check_branch
          %590 = sbr.rel (%p588) target = $region56
        $region55: #{base_encoder_forward.1} parent=39 // pred_region
          %p591 = scmp.lt.s32.totalorder %s34, 1
          %s592 = scalar_select %p591, %s34, 1
          %s593 = scalar_lea.vmem %s7, %s592
        $region56: #{base_encoder_forward.1} parent=39 // pred_fallthru
          _
        // Predicated region
        $region57: #{base_encoder_forward.1} parent=39 // pred_check
          %p594 = pneg %p242
        $region58: #{base_encoder_forward.1} parent=39 // pred_check_branch
          %596 = sbr.rel (%p594) target = $region60
        $region59: #{base_encoder_forward.1} parent=39 // pred_region
          %p597 = scmp.lt.s32.totalorder %s34, 1
          %s598 = scalar_select %p597, %s34, 1
          %s599 = scalar_lea.vmem %s8, %s598
        $region60: #{base_encoder_forward.1} parent=39 // pred_fallthru
          _
        // Predicated region
        $region61: #{base_encoder_forward.1} parent=39 // pred_check
          %p600 = pneg %p268
        $region62: #{base_encoder_forward.1} parent=39 // pred_check_branch
          %602 = sbr.rel (%p600) target = $region64
        $region63: #{base_encoder_forward.1} parent=39 // pred_region
          %p603 = scmp.lt.s32.totalorder %s34, 1
          %s604 = scalar_select %p603, %s34, 1
          %s605 = scalar_lea.vmem %s9, %s604
        $region64: #{base_encoder_forward.1} parent=39 // pred_fallthru
          _
        // Predicated region
        $region65: #{base_encoder_forward.1} parent=39 // pred_check
          %p606 = pneg %p294
        $region66: #{base_encoder_forward.1} parent=39 // pred_check_branch
          %608 = sbr.rel (%p606) target = $region68
        $region67: #{base_encoder_forward.1} parent=39 // pred_region
          %s609 = sand.u32 %s34, 1
          %s610 = scalar_lea.sflag [#allocation7], %s609
          %s611 = sand.u32 %s284, 1
          %s612 = smul.addr %s611, 128
          %s613 = scalar_lea.vmem [#allocation6], %s612
          %615 = vsyncadd %s610, 0
          %s616 = smul.addr %s34, 32
          %s617 = smul.addr %s616, 4
          %s618 = scalar_lea.hbm %s10, %s617
          %s619 = sshll.u32 %s618, 4
          %s620 = int_to_ptr.hbm [resolvable:$true] %s619
          %s621 = sshll.u32 %s613, 4
          %s622 = int_to_ptr.vmem [resolvable:$true] %s621
          %627 = dma.hbm_to_vmem [thread:$0]  %s620, 2048, %s622, %s610, 128, 128, 8
        $region68: #{base_encoder_forward.1} parent=39 // pred_fallthru
          _
        // Predicated region
        $region69: #{base_encoder_forward.1} parent=39 // pred_check
          %p628 = pneg %p320
        $region70: #{base_encoder_forward.1} parent=39 // pred_check_branch
          %630 = sbr.rel (%p628) target = $region72
        $region71: #{base_encoder_forward.1} parent=39 // pred_region
          %p631 = scmp.lt.s32.totalorder %s34, 1
          %s632 = scalar_select %p631, %s34, 1
          %s633 = smul.addr %s632, 2
          %s634 = scalar_lea.vmem %s11, %s633
        $region72: #{base_encoder_forward.1} parent=39 // pred_fallthru
          _
        // Predicated region
        $region73: #{base_encoder_forward.1} parent=39 // pred_check
          %p635 = pneg %p346
        $region74: #{base_encoder_forward.1} parent=39 // pred_check_branch
          %637 = sbr.rel (%p635) target = $region76
        $region75: #{base_encoder_forward.1} parent=39 // pred_region
          %s638 = sand.u32 %s34, 1
          %s639 = scalar_lea.sflag [#allocation7], %s638
          %s640 = sand.u32 %s336, 1
          %s641 = smul.addr %s640, 128
          %s642 = scalar_lea.vmem [#allocation8], %s641
          %644 = vsyncadd %s639, 0
          %s645 = smul.addr %s34, 32
          %s646 = smul.addr %s645, 4
          %s647 = scalar_lea.hbm %s12, %s646
          %s648 = sshll.u32 %s647, 4
          %s649 = int_to_ptr.hbm [resolvable:$true] %s648
          %s650 = sshll.u32 %s642, 4
          %s651 = int_to_ptr.vmem [resolvable:$true] %s650
          %656 = dma.hbm_to_vmem [thread:$0]  %s649, 2048, %s651, %s639, 64, 64, 4
        $region76: #{base_encoder_forward.1} parent=39 // pred_fallthru
          _
        // Predicated region
        $region77: #{base_encoder_forward.1} parent=39 // pred_check
          %p657 = pneg %p372
        $region78: #{base_encoder_forward.1} parent=39 // pred_check_branch
          %659 = sbr.rel (%p657) target = $region80
        $region79: #{base_encoder_forward.1} parent=39 // pred_region
          %p660 = scmp.lt.s32.totalorder %s34, 1
          %s661 = scalar_select %p660, %s34, 1
          %s662 = scalar_lea.vmem %s13, %s661
        $region80: #{base_encoder_forward.1} parent=39 // pred_fallthru
          _
        // Predicated region
        $region81: #{base_encoder_forward.1} parent=39 // pred_check
          %p663 = pneg %p398
        $region82: #{base_encoder_forward.1} parent=39 // pred_check_branch
          %665 = sbr.rel (%p663) target = $region84
        $region83: #{base_encoder_forward.1} parent=39 // pred_region
          %p666 = scmp.lt.s32.totalorder %s34, 1
          %s667 = scalar_select %p666, %s34, 1
          %s668 = scalar_lea.vmem %s14, %s667
        $region84: #{base_encoder_forward.1} parent=39 // pred_fallthru
          _
        // Predicated region
        $region85: #{base_encoder_forward.1} parent=39 // pred_check
          %p669 = pneg %p424
        $region86: #{base_encoder_forward.1} parent=39 // pred_check_branch
          %671 = sbr.rel (%p669) target = $region88
        $region87: #{base_encoder_forward.1} parent=39 // pred_region
          %p672 = scmp.lt.s32.totalorder %s34, 1
          %s673 = scalar_select %p672, %s34, 1
          %s674 = scalar_lea.vmem %s15, %s673
        $region88: #{base_encoder_forward.1} parent=39 // pred_fallthru
          _
      $region40: #{base_encoder_forward.1} parent=5 // pred_fallthru
        _
      %p675 = scmp.le.s32.totalorder 1, %s34
      %p676 = scmp.lt.s32.totalorder %s34, 3
      %p677 = pnand %p675, %p676
      %p678 = pneg %p677
      // Predicated region
      $region89: #{base_encoder_forward.1} parent=5 // pred_check
        _
      $region90: #{base_encoder_forward.1} parent=5 // pred_check_branch
        %680 = sbr.rel (%p677) target = $region92
      $region91: #{base_encoder_forward.1} parent=5 // pred_region
        %s681 = ssub.s32 %s34, 1
        %s682 = sand.u32 %s131, 1
        %s683 = scalar_lea.sflag [#allocation4], %s682
        %s684 = sand.u32 %s131, 1
        %s685 = smul.addr %s684, 192
        %s686 = scalar_lea.vmem [#allocation3], %s685
        // Predicated region
        $region93: #{base_encoder_forward.1} parent=91 // pred_check
          %p687 = pneg %p144
        $region94: #{base_encoder_forward.1} parent=91 // pred_check_branch
          %689 = sbr.rel (%p687) target = $region96
        $region95: #{base_encoder_forward.1} parent=91 // pred_region
          %691 = dma.done %s683, 3072
        $region96: #{base_encoder_forward.1} parent=91 // pred_fallthru
          _
        %s692 = sand.u32 %s39, 1
        %s693 = scalar_lea.sflag [#allocation7], %s692
        %s694 = sand.u32 %s287, 1
        %s695 = smul.addr %s694, 128
        %s696 = scalar_lea.vmem [#allocation6], %s695
        // Predicated region
        $region97: #{base_encoder_forward.1} parent=91 // pred_check
          %p697 = pneg %p300
        $region98: #{base_encoder_forward.1} parent=91 // pred_check_branch
          %699 = sbr.rel (%p697) target = $region100
        $region99: #{base_encoder_forward.1} parent=91 // pred_region
          %701 = dma.done %s693, 2048
        $region100: #{base_encoder_forward.1} parent=91 // pred_fallthru
          _
        %s702 = sand.u32 %s39, 1
        %s703 = scalar_lea.sflag [#allocation7], %s702
        %s704 = sand.u32 %s339, 1
        %s705 = smul.addr %s704, 128
        %s706 = scalar_lea.vmem [#allocation8], %s705
        // Predicated region
        $region101: #{base_encoder_forward.1} parent=91 // pred_check
          %p707 = pneg %p352
        $region102: #{base_encoder_forward.1} parent=91 // pred_check_branch
          %709 = sbr.rel (%p707) target = $region104
        $region103: #{base_encoder_forward.1} parent=91 // pred_region
          %711 = dma.done %s703, 2048
        $region104: #{base_encoder_forward.1} parent=91 // pred_fallthru
          _
        %p712 = pneg %p55
        %p713 = pneg %p52
        %p714 = pneg %p76
        %p715 = pneg %p73
        %p716 = pneg %p97
        %p717 = pneg %p94
        %p718 = pneg %p118
        %p719 = pneg %p115
        %s720 = sand.u32 %s131, 1
        %s721 = scalar_lea.sflag [#allocation4], %s720
        %s722 = sand.u32 %s131, 1
        %s723 = smul.addr %s722, 192
        %s724 = scalar_lea.vmem [#allocation3], %s723
        %p725 = pneg %p144
        %p726 = pneg %p141
        %p727 = scmp.lt.s32.totalorder %s39, 1
        %s728 = scalar_select %p727, %s39, 1
        %s729 = smul.addr %s728, 3
        %s730 = scalar_lea.vmem %s5, %s729
        %p731 = pneg %p170
        %p732 = pneg %p167
        %p733 = scmp.lt.s32.totalorder %s39, 1
        %s734 = scalar_select %p733, %s39, 1
        %s735 = smul.addr %s734, 16
        %s736 = smul.addr %s735, 4
        %s737 = scalar_lea.vmem %s6, %s736
        %p738 = pneg %p196
        %p739 = pneg %p193
        %p740 = scmp.lt.s32.totalorder %s39, 1
        %s741 = scalar_select %p740, %s39, 1
        %s742 = scalar_lea.vmem %s7, %s741
        %p743 = pneg %p222
        %p744 = pneg %p219
        %p745 = scmp.lt.s32.totalorder %s39, 1
        %s746 = scalar_select %p745, %s39, 1
        %s747 = scalar_lea.vmem %s8, %s746
        %p748 = pneg %p248
        %p749 = pneg %p245
        %p750 = scmp.lt.s32.totalorder %s39, 1
        %s751 = scalar_select %p750, %s39, 1
        %s752 = scalar_lea.vmem %s9, %s751
        %p753 = pneg %p274
        %p754 = pneg %p271
        %s755 = sand.u32 %s39, 1
        %s756 = scalar_lea.sflag [#allocation7], %s755
        %s757 = sand.u32 %s287, 1
        %s758 = smul.addr %s757, 128
        %s759 = scalar_lea.vmem [#allocation6], %s758
        %p760 = pneg %p300
        %p761 = pneg %p297
        %p762 = scmp.lt.s32.totalorder %s39, 1
        %s763 = scalar_select %p762, %s39, 1
        %s764 = smul.addr %s763, 2
        %s765 = scalar_lea.vmem %s11, %s764
        %p766 = pneg %p326
        %p767 = pneg %p323
        %s768 = sand.u32 %s39, 1
        %s769 = scalar_lea.sflag [#allocation7], %s768
        %s770 = sand.u32 %s339, 1
        %s771 = smul.addr %s770, 128
        %s772 = scalar_lea.vmem [#allocation8], %s771
        %p773 = pneg %p352
        %p774 = pneg %p349
        %p775 = scmp.lt.s32.totalorder %s39, 1
        %s776 = scalar_select %p775, %s39, 1
        %s777 = scalar_lea.vmem %s13, %s776
        %p778 = pneg %p378
        %p779 = pneg %p375
        %p780 = scmp.lt.s32.totalorder %s39, 1
        %s781 = scalar_select %p780, %s39, 1
        %s782 = scalar_lea.vmem %s14, %s781
        %p783 = pneg %p404
        %p784 = pneg %p401
        %p785 = scmp.lt.s32.totalorder %s39, 1
        %s786 = scalar_select %p785, %s39, 1
        %s787 = scalar_lea.vmem %s15, %s786
        %p788 = pneg %p430
        %p789 = pneg %p427
        %p790 = pneg %p451
        %p791 = pneg %p448
        %p792 = pneg %p472
        %p793 = pneg %p469
        %p794 = pneg %p493
        %p795 = pneg %p490
        %p796 = pneg %p514
        %p797 = pneg %p511
        %p798 = scmp.lt.s32.totalorder %s39, 1
        %s799 = scalar_select %p798, %s39, 1
        %s800 = smul.addr %s799, 3
        %s801 = scalar_lea.vmem %s5, %s800
        %p802 = scmp.lt.s32.totalorder %s39, 1
        %s803 = scalar_select %p802, %s39, 1
        %s804 = smul.addr %s803, 16
        %s805 = smul.addr %s804, 4
        %s806 = scalar_lea.vmem %s6, %s805
        %p807 = scmp.lt.s32.totalorder %s39, 1
        %s808 = scalar_select %p807, %s39, 1
        %s809 = scalar_lea.vmem %s7, %s808
        %p810 = scmp.lt.s32.totalorder %s39, 1
        %s811 = scalar_select %p810, %s39, 1
        %s812 = scalar_lea.vmem %s8, %s811
        %p813 = scmp.lt.s32.totalorder %s39, 1
        %s814 = scalar_select %p813, %s39, 1
        %s815 = scalar_lea.vmem %s9, %s814
        %p816 = scmp.lt.s32.totalorder %s39, 1
        %s817 = scalar_select %p816, %s39, 1
        %s818 = smul.addr %s817, 2
        %s819 = scalar_lea.vmem %s11, %s818
        %p820 = scmp.lt.s32.totalorder %s39, 1
        %s821 = scalar_select %p820, %s39, 1
        %s822 = scalar_lea.vmem %s13, %s821
        %p823 = scmp.lt.s32.totalorder %s39, 1
        %s824 = scalar_select %p823, %s39, 1
        %s825 = scalar_lea.vmem %s14, %s824
        %p826 = scmp.lt.s32.totalorder %s39, 1
        %s827 = scalar_select %p826, %s39, 1
        %s828 = scalar_lea.vmem %s15, %s827
        %p830 = scmp.eq.s32.totalorder %s39, 0
        // Predicated region
        $region105: #{base_encoder_forward.1} parent=91 // pred_check
          %p831 = pneg %p830
        $region106: #{base_encoder_forward.1} parent=91 // pred_check_branch
          %833 = sbr.rel (%p831) target = $region108
        $region107: #{base_encoder_forward.1} parent=91 // pred_region
          %v834 = vld [vmem:[%s0] sm:$0xff]
          %v835 = vld [vmem:[%s0 + $0x8] sm:$0xff]
          %v836 = vld [vmem:[%s1] sm:$0x1]
          %v837 = vld [vmem:[%s2] sm:$0x1]
          %838 = vadd.xlane.f32.xlu0 %v834
          %v839 = vpop.xlane.xlu0 %838
          %840 = vadd.xlane.f32.xlu0 %v835
          %v841 = vpop.xlane.xlu0 %840
          %v842 = vrcp.pop 128.0
          %v843 = vmul.f32 128.0, %v842
          %v844 = vsub.f32 1.0, %v843
          %v845 = vmul.f32 %v842, %v844
          %v846 = vadd.f32 %v842, %v845
          %vm847 = vweird.f32 %v842
          %v848 = vsel %vm847, %v842, %v846
          %v849 = vmul.f32 %v839, %v848
          %v850 = vmul.f32 %v841, %v848
          %v851 = vsub.f32 %v834, %v849
          %v852 = vsub.f32 %v835, %v850
          %v853 = vmul.f32 %v851, %v851
          %v854 = vmul.f32 %v852, %v852
          %855 = vadd.xlane.f32.xlu0 %v853
          %v856 = vpop.xlane.xlu0 %855
          %857 = vadd.xlane.f32.xlu0 %v854
          %v858 = vpop.xlane.xlu0 %857
          %v859 = vmul.f32 %v856, %v848
          %v860 = vmul.f32 %v858, %v848
          %v861 = vadd.f32 %v859, 1e-12
          %v862 = vadd.f32 %v860, 1e-12
          %v863 = vrsqrt.pop %v861
          %v864 = vmul.f32 %v863, %v861
          %v865 = vmul.f32 %v864, %v863
          %v866 = vmul.f32 0.5, %v865
          %v867 = vsub.f32 1.5, %v866
          %v868 = vmul.f32 %v863, %v867
          %vm869 = vweird.f32 %v861
          %vm870 = vweird.f32 %v863
          %vm871 = vmor %vm869, %vm870
          %v872 = vsel %vm871, %v863, %v868
          %v873 = vrsqrt.pop %v862
          %v874 = vmul.f32 %v873, %v862
          %v875 = vmul.f32 %v874, %v873
          %v876 = vmul.f32 0.5, %v875
          %v877 = vsub.f32 1.5, %v876
          %v878 = vmul.f32 %v873, %v877
          %vm879 = vweird.f32 %v862
          %vm880 = vweird.f32 %v873
          %vm881 = vmor %vm879, %vm880
          %v882 = vsel %vm881, %v873, %v878
          %v883 = vmul.f32 %v851, %v872
          %v884 = vmul.f32 %v852, %v882
          %v886 = vperm.slane %v836, 0
          %v888 = vmul.f32 %v883, %v886
          %v889 = vmul.f32 %v884, %v886
          %v891 = vperm.slane %v837, 0
          %v893 = vadd.f32 %v888, %v891
          %v894 = vadd.f32 %v889, %v891
          %895 = vst [vmem:[#allocation2] sm:$0xff] %v893
          %896 = vst [vmem:[#allocation2 + $0x8] sm:$0xff] %v894
        $region108: #{base_encoder_forward.1} parent=91 // pred_fallthru
          _
        %v897 = vld [vmem:[#allocation2] sm:$0xff]
        %v898 = vld [vmem:[#allocation2 + $0x8] sm:$0xff]
        %v899 = vpack.c.bf16 %v898, %v897
        %v900 = vld [vmem:[%s686] sm:$0xff]
        %v901 = vld [vmem:[%s686 + $0x8] sm:$0xf]
        %v902 = vld [vmem:[%s686 + $0xc] sm:$0xff]
        %v903 = vld [vmem:[%s686 + $0x14] sm:$0xf]
        %v904 = vld [vmem:[%s686 + $0x18] sm:$0xff]
        %v905 = vld [vmem:[%s686 + $0x20] sm:$0xf]
        %v906 = vld [vmem:[%s686 + $0x24] sm:$0xff]
        %v907 = vld [vmem:[%s686 + $0x2c] sm:$0xf]
        %v908 = vld [vmem:[%s686 + $0x30] sm:$0xff]
        %v909 = vld [vmem:[%s686 + $0x38] sm:$0xf]
        %v910 = vld [vmem:[%s686 + $0x3c] sm:$0xff]
        %v911 = vld [vmem:[%s686 + $0x44] sm:$0xf]
        %v912 = vld [vmem:[%s686 + $0x48] sm:$0xff]
        %v913 = vld [vmem:[%s686 + $0x50] sm:$0xf]
        %v914 = vld [vmem:[%s686 + $0x54] sm:$0xff]
        %v915 = vld [vmem:[%s686 + $0x5c] sm:$0xf]
        %v916 = vld [vmem:[%s686 + $0x60] sm:$0xff]
        %v917 = vld [vmem:[%s686 + $0x68] sm:$0xf]
        %v918 = vld [vmem:[%s686 + $0x6c] sm:$0xff]
        %v919 = vld [vmem:[%s686 + $0x74] sm:$0xf]
        %v920 = vld [vmem:[%s686 + $0x78] sm:$0xff]
        %v921 = vld [vmem:[%s686 + $0x80] sm:$0xf]
        %v922 = vld [vmem:[%s686 + $0x84] sm:$0xff]
        %v923 = vld [vmem:[%s686 + $0x8c] sm:$0xf]
        %v924 = vld [vmem:[%s686 + $0x90] sm:$0xff]
        %v925 = vld [vmem:[%s686 + $0x98] sm:$0xf]
        %v926 = vld [vmem:[%s686 + $0x9c] sm:$0xff]
        %v927 = vld [vmem:[%s686 + $0xa4] sm:$0xf]
        %v928 = vld [vmem:[%s686 + $0xa8] sm:$0xff]
        %v929 = vld [vmem:[%s686 + $0xb0] sm:$0xf]
        %v930 = vld [vmem:[%s686 + $0xb4] sm:$0xff]
        %v931 = vld [vmem:[%s686 + $0xbc] sm:$0xf]
        %v932 = vld [vmem:[%s801] sm:$0x7]
        %v934 = vperm.slane %v932, 0
        %v935 = vperm.slane %v932, 1
        %v936 = vperm.slane %v932, 2
        %v972 = vunpack.c.l.b16 %v900
        %v973 = vunpack.c.h.b16 %v900
        %v974 = vunpack.c.l.b16 %v901
        %v975 = vunpack.c.l.b16 %v902
        %v976 = vunpack.c.h.b16 %v902
        %v977 = vunpack.c.l.b16 %v903
        %v978 = vunpack.c.l.b16 %v904
        %v979 = vunpack.c.h.b16 %v904
        %v980 = vunpack.c.l.b16 %v905
        %v981 = vunpack.c.l.b16 %v906
        %v982 = vunpack.c.h.b16 %v906
        %v983 = vunpack.c.l.b16 %v907
        %v984 = vunpack.c.l.b16 %v908
        %v985 = vunpack.c.h.b16 %v908
        %v986 = vunpack.c.l.b16 %v909
        %v987 = vunpack.c.l.b16 %v910
        %v988 = vunpack.c.h.b16 %v910
        %v989 = vunpack.c.l.b16 %v911
        %v990 = vunpack.c.l.b16 %v912
        %v991 = vunpack.c.h.b16 %v912
        %v992 = vunpack.c.l.b16 %v913
        %v993 = vunpack.c.l.b16 %v914
        %v994 = vunpack.c.h.b16 %v914
        %v995 = vunpack.c.l.b16 %v915
        %v996 = vunpack.c.l.b16 %v916
        %v997 = vunpack.c.h.b16 %v916
        %v998 = vunpack.c.l.b16 %v917
        %v999 = vunpack.c.l.b16 %v918
        %v1000 = vunpack.c.h.b16 %v918
        %v1001 = vunpack.c.l.b16 %v919
        %v1002 = vunpack.c.l.b16 %v920
        %v1003 = vunpack.c.h.b16 %v920
        %v1004 = vunpack.c.l.b16 %v921
        %v1005 = vunpack.c.l.b16 %v922
        %v1006 = vunpack.c.h.b16 %v922
        %v1007 = vunpack.c.l.b16 %v923
        %v1008 = vunpack.c.l.b16 %v924
        %v1009 = vunpack.c.h.b16 %v924
        %v1010 = vunpack.c.l.b16 %v925
        %v1011 = vunpack.c.l.b16 %v926
        %v1012 = vunpack.c.h.b16 %v926
        %v1013 = vunpack.c.l.b16 %v927
        %v1014 = vunpack.c.l.b16 %v928
        %v1015 = vunpack.c.h.b16 %v928
        %v1016 = vunpack.c.l.b16 %v929
        %v1017 = vunpack.c.l.b16 %v930
        %v1018 = vunpack.c.h.b16 %v930
        %v1019 = vunpack.c.l.b16 %v931
        %v1020 = vpack.c.b16 %v975, %v972
        %v1021 = vpack.c.b16 %v976, %v973
        %v1022 = vpack.c.b16 %v977, %v974
        %v1023 = vpack.c.b16 %v981, %v978
        %v1024 = vpack.c.b16 %v982, %v979
        %v1025 = vpack.c.b16 %v983, %v980
        %v1026 = vpack.c.b16 %v987, %v984
        %v1027 = vpack.c.b16 %v988, %v985
        %v1028 = vpack.c.b16 %v989, %v986
        %v1029 = vpack.c.b16 %v993, %v990
        %v1030 = vpack.c.b16 %v994, %v991
        %v1031 = vpack.c.b16 %v995, %v992
        %v1032 = vpack.c.b16 %v999, %v996
        %v1033 = vpack.c.b16 %v1000, %v997
        %v1034 = vpack.c.b16 %v1001, %v998
        %v1035 = vpack.c.b16 %v1005, %v1002
        %v1036 = vpack.c.b16 %v1006, %v1003
        %v1037 = vpack.c.b16 %v1007, %v1004
        %v1038 = vpack.c.b16 %v1011, %v1008
        %v1039 = vpack.c.b16 %v1012, %v1009
        %v1040 = vpack.c.b16 %v1013, %v1010
        %v1041 = vpack.c.b16 %v1017, %v1014
        %v1042 = vpack.c.b16 %v1018, %v1015
        %v1043 = vpack.c.b16 %v1019, %v1016
        %1068 = vmatpush.bf16.msra.mxu0 %v1041
        %1069 = vmatpush.bf16.msra.mxu0 %v1038
        %1070 = vmatpush.bf16.msra.mxu0 %v1035
        %1071 = vmatpush.bf16.msra.mxu0 %v1032
        %1072 = vmatpush.bf16.msra.mxu0 %v1029
        %1073 = vmatpush.bf16.msra.mxu0 %v1026
        %1074 = vmatpush.bf16.msra.mxu0 %v1023
        %1075 = vmatpush.bf16.msra.mxu0 %v1020
        %1076 = vmatmul.bf16.gmra.mxu0 %v899
        %v1077 = vpop.f32.mrf.mxu0
        %v1078 = vadd.f32 %v934, %v1077
        %v1079 = vpop.f32.mrf.mxu0
        %v1080 = vadd.f32 %v934, %v1079
        %1081 = vdwg.mxu0
        %1082 = vmatpush.bf16.msra.mxu0 %v1042
        %1083 = vmatpush.bf16.msra.mxu0 %v1039
        %1084 = vmatpush.bf16.msra.mxu0 %v1036
        %1085 = vmatpush.bf16.msra.mxu0 %v1033
        %1086 = vmatpush.bf16.msra.mxu0 %v1030
        %1087 = vmatpush.bf16.msra.mxu0 %v1027
        %1088 = vmatpush.bf16.msra.mxu0 %v1024
        %1089 = vmatpush.bf16.msra.mxu0 %v1021
        %1090 = vmatmul.bf16.gmra.mxu0 %v899
        %v1091 = vpop.f32.mrf.mxu0
        %v1092 = vadd.f32 %v935, %v1091
        %v1093 = vpop.f32.mrf.mxu0
        %v1094 = vadd.f32 %v935, %v1093
        %1095 = vdwg.mxu0
        %1096 = vmatpush.bf16.msra.mxu0 %v1043
        %1097 = vmatpush.bf16.msra.mxu0 %v1040
        %1098 = vmatpush.bf16.msra.mxu0 %v1037
        %1099 = vmatpush.bf16.msra.mxu0 %v1034
        %1100 = vmatpush.bf16.msra.mxu0 %v1031
        %1101 = vmatpush.bf16.msra.mxu0 %v1028
        %1102 = vmatpush.bf16.msra.mxu0 %v1025
        %1103 = vmatpush.bf16.msra.mxu0 %v1022
        %1104 = vmatmul.bf16.gmra.mxu0 %v899
        %v1105 = vpop.f32.mrf.mxu0
        %v1106 = vadd.f32 %v936, %v1105
        %v1107 = vpop.f32.mrf.mxu0
        %v1108 = vadd.f32 %v936, %v1107
        %1109 = vdwg.mxu0
        %v1110 = vmul.f32 %v1078, 0.125
        %v1111 = vmul.f32 %v1080, 0.125
        %v1112 = vld [vmem:[%s3] sm:$0xff]
        %v1113 = vld [vmem:[%s3 + $0x8] sm:$0xff]
        %v1114 = vld [vmem:[%s806] sm:$0xf]
        %v1115 = vld [vmem:[%s806 + $0x4] sm:$0xf]
        %v1116 = vld [vmem:[%s806 + $0x8] sm:$0xf]
        %v1117 = vld [vmem:[%s806 + $0xc] sm:$0xf]
        %v1118 = vld [vmem:[%s806 + $0x10] sm:$0xf]
        %v1119 = vld [vmem:[%s806 + $0x14] sm:$0xf]
        %v1120 = vld [vmem:[%s806 + $0x18] sm:$0xf]
        %v1121 = vld [vmem:[%s806 + $0x1c] sm:$0xf]
        %v1122 = vld [vmem:[%s806 + $0x20] sm:$0xf]
        %v1123 = vld [vmem:[%s806 + $0x24] sm:$0xf]
        %v1124 = vld [vmem:[%s806 + $0x28] sm:$0xf]
        %v1125 = vld [vmem:[%s806 + $0x2c] sm:$0xf]
        %v1126 = vld [vmem:[%s806 + $0x30] sm:$0xf]
        %v1127 = vld [vmem:[%s806 + $0x34] sm:$0xf]
        %v1128 = vld [vmem:[%s806 + $0x38] sm:$0xf]
        %v1129 = vld [vmem:[%s806 + $0x3c] sm:$0xf]
        %v1130 = vpack.c.bf16 %v1111, %v1110
        %v1131 = vpack.c.bf16 %v1094, %v1092
        %v1132 = vpack.c.bf16 %v1108, %v1106
        %vm1133 = vcmask 523264
        %v1135 = vsel %vm1133, %v1130, 0
        %v1138 = vsel %vm1133, %v1131, 0
        %1140 = vmatpush.bf16.xpose.msra.mxu0 0
        %1141 = vmatpush.bf16.xpose.msra.mxu0 0
        %1142 = vmatpush.bf16.xpose.msra.mxu0 0
        %1143 = vmatpush.bf16.xpose.msra.mxu0 0
        %1144 = vmatpush.bf16.xpose.msra.mxu0 0
        %1145 = vmatpush.bf16.xpose.msra.mxu0 0
        %1146 = vmatpush.bf16.xpose.msra.mxu0 0
        %1147 = vmatpush.bf16.xpose.msra.mxu0 %v1138
        %1148 = vmatmul.bf16.gmra.mxu0 %v1135
        %v1149 = vpop.f32.mrf.mxu0
        %v1150 = vadd.f32 %v1112, %v1149
        %v1151 = vpop.f32.mrf.mxu0
        %v1152 = vadd.f32 %v1113, %v1151
        %1153 = vdwg.mxu0
        %vm1154 = vcmask 130048
        %v1155 = vsel %vm1154, %v1150, -inf
        %1156 = vmax.xlane.f32.xlu0 %v1155
        %v1157 = vpop.xlane.xlu0 %1156
        %v1158 = vsel %vm1154, %v1152, -inf
        %1159 = vmax.xlane.f32.xlu0 %v1158
        %v1160 = vpop.xlane.xlu0 %1159
        %v1161 = vsub.f32 %v1150, %v1157
        %v1162 = vsub.f32 %v1152, %v1160
        %v1163 = vmul.f32 %v1161, 1.442695
        %v1164 = vpow.pop %v1163
        %v1165 = vmul.f32 %v1162, 1.442695
        %v1166 = vpow.pop %v1165
        %v1167 = vsel %vm1154, %v1164, 0.0
        %1168 = vadd.xlane.f32.xlu0 %v1167
        %v1169 = vpop.xlane.xlu0 %1168
        %v1170 = vsel %vm1154, %v1166, 0.0
        %1171 = vadd.xlane.f32.xlu0 %v1170
        %v1172 = vpop.xlane.xlu0 %1171
        %v1173 = vrcp.pop %v1169
        %v1174 = vrcp.pop %v1172
        %v1175 = vmul.f32 %v1164, %v1173
        %v1176 = vmul.f32 %v1166, %v1174
        %v1177 = vpack.c.bf16 %v1176, %v1175
        %v1179 = vsel %vm1154, %v1177, 0
        %1181 = vmatpush.bf16.msra.mxu0 0
        %1182 = vmatpush.bf16.msra.mxu0 0
        %1183 = vmatpush.bf16.msra.mxu0 0
        %1184 = vmatpush.bf16.msra.mxu0 0
        %1185 = vmatpush.bf16.msra.mxu0 0
        %1186 = vmatpush.bf16.msra.mxu0 0
        %1187 = vmatpush.bf16.msra.mxu0 0
        %1188 = vmatpush.bf16.msra.mxu0 %v1132
        %1189 = vmatmul.bf16.gmra.mxu0 %v1179
        %v1190 = vpop.f32.mrf.mxu0
        %v1191 = vadd.f32 0.0, %v1190
        %v1192 = vpop.f32.mrf.mxu0
        %v1193 = vadd.f32 0.0, %v1192
        %1194 = vdwg.mxu0
        %v1195 = vpack.c.bf16 %v1193, %v1191
        %1197 = vrot.lane.b32.xlu0 %v1130, 64
        %v1198 = vpop.permute.xlu0 %1197
        %1200 = vrot.lane.b32.xlu0 %v1131, 64
        %v1201 = vpop.permute.xlu0 %1200
        %v1203 = vsel %vm1133, %v1198, 0
        %v1206 = vsel %vm1133, %v1201, 0
        %1208 = vmatpush.bf16.xpose.msra.mxu0 0
        %1209 = vmatpush.bf16.xpose.msra.mxu0 0
        %1210 = vmatpush.bf16.xpose.msra.mxu0 0
        %1211 = vmatpush.bf16.xpose.msra.mxu0 0
        %1212 = vmatpush.bf16.xpose.msra.mxu0 0
        %1213 = vmatpush.bf16.xpose.msra.mxu0 0
        %1214 = vmatpush.bf16.xpose.msra.mxu0 0
        %1215 = vmatpush.bf16.xpose.msra.mxu0 %v1206
        %1216 = vmatmul.bf16.gmra.mxu0 %v1203
        %v1217 = vpop.f32.mrf.mxu0
        %v1218 = vadd.f32 %v1112, %v1217
        %v1219 = vpop.f32.mrf.mxu0
        %v1220 = vadd.f32 %v1113, %v1219
        %1221 = vdwg.mxu0
        %v1222 = vsel %vm1154, %v1218, -inf
        %1223 = vmax.xlane.f32.xlu0 %v1222
        %v1224 = vpop.xlane.xlu0 %1223
        %v1225 = vsel %vm1154, %v1220, -inf
        %1226 = vmax.xlane.f32.xlu0 %v1225
        %v1227 = vpop.xlane.xlu0 %1226
        %v1228 = vsub.f32 %v1218, %v1224
        %v1229 = vsub.f32 %v1220, %v1227
        %v1230 = vmul.f32 %v1228, 1.442695
        %v1231 = vpow.pop %v1230
        %v1232 = vmul.f32 %v1229, 1.442695
        %v1233 = vpow.pop %v1232
        %v1234 = vsel %vm1154, %v1231, 0.0
        %1235 = vadd.xlane.f32.xlu0 %v1234
        %v1236 = vpop.xlane.xlu0 %1235
        %v1237 = vsel %vm1154, %v1233, 0.0
        %1238 = vadd.xlane.f32.xlu0 %v1237
        %v1239 = vpop.xlane.xlu0 %1238
        %v1240 = vrcp.pop %v1236
        %v1241 = vrcp.pop %v1239
        %v1242 = vmul.f32 %v1231, %v1240
        %v1243 = vmul.f32 %v1233, %v1241
        %v1244 = vpack.c.bf16 %v1243, %v1242
        %1246 = vrot.lane.b32.xlu0 %v1132, 64
        %v1247 = vpop.permute.xlu0 %1246
        %v1250 = vsel %vm1154, %v1244, 0
        %1252 = vmatpush.bf16.msra.mxu0 0
        %1253 = vmatpush.bf16.msra.mxu0 0
        %1254 = vmatpush.bf16.msra.mxu0 0
        %1255 = vmatpush.bf16.msra.mxu0 0
        %1256 = vmatpush.bf16.msra.mxu0 0
        %1257 = vmatpush.bf16.msra.mxu0 0
        %1258 = vmatpush.bf16.msra.mxu0 0
        %1259 = vmatpush.bf16.msra.mxu0 %v1247
        %1260 = vmatmul.bf16.gmra.mxu0 %v1250
        %v1261 = vpop.f32.mrf.mxu0
        %v1262 = vadd.f32 0.0, %v1261
        %v1263 = vpop.f32.mrf.mxu0
        %v1264 = vadd.f32 0.0, %v1263
        %1265 = vdwg.mxu0
        %v1266 = vpack.c.bf16 %v1264, %v1262
        %v1275 = vunpack.c.l.b16 %v1122
        %v1276 = vunpack.c.l.b16 %v1123
        %v1277 = vunpack.c.l.b16 %v1124
        %v1278 = vunpack.c.l.b16 %v1125
        %v1279 = vunpack.c.l.b16 %v1126
        %v1280 = vunpack.c.l.b16 %v1127
        %v1281 = vunpack.c.l.b16 %v1128
        %v1282 = vunpack.c.l.b16 %v1129
        %v1283 = vpack.c.b16 %v1276, %v1275
        %v1284 = vpack.c.b16 %v1278, %v1277
        %v1285 = vpack.c.b16 %v1280, %v1279
        %v1286 = vpack.c.b16 %v1282, %v1281
        %v1292 = vsel %vm1133, %v1266, 0
        %1294 = vmatpush.bf16.msra.mxu0 0
        %1295 = vmatpush.bf16.msra.mxu0 0
        %1296 = vmatpush.bf16.msra.mxu0 0
        %1297 = vmatpush.bf16.msra.mxu0 0
        %1298 = vmatpush.bf16.msra.mxu0 %v1286
        %1299 = vmatpush.bf16.msra.mxu0 %v1285
        %1300 = vmatpush.bf16.msra.mxu0 %v1284
        %1301 = vmatpush.bf16.msra.mxu0 %v1283
        %1302 = vmatmul.bf16.gmra.mxu0 %v1292
        %v1303 = vpop.f32.mrf.mxu0
        %v1304 = vadd.f32 0.0, %v1303
        %v1305 = vpop.f32.mrf.mxu0
        %v1306 = vadd.f32 0.0, %v1305
        %1307 = vdwg.mxu0
        %v1316 = vunpack.c.l.b16 %v1114
        %v1317 = vunpack.c.l.b16 %v1115
        %v1318 = vunpack.c.l.b16 %v1116
        %v1319 = vunpack.c.l.b16 %v1117
        %v1320 = vunpack.c.l.b16 %v1118
        %v1321 = vunpack.c.l.b16 %v1119
        %v1322 = vunpack.c.l.b16 %v1120
        %v1323 = vunpack.c.l.b16 %v1121
        %v1324 = vpack.c.b16 %v1317, %v1316
        %v1325 = vpack.c.b16 %v1319, %v1318
        %v1326 = vpack.c.b16 %v1321, %v1320
        %v1327 = vpack.c.b16 %v1323, %v1322
        %v1333 = vsel %vm1133, %v1195, 0
        %1335 = vmatpush.bf16.msra.mxu0 0
        %1336 = vmatpush.bf16.msra.mxu0 0
        %1337 = vmatpush.bf16.msra.mxu0 0
        %1338 = vmatpush.bf16.msra.mxu0 0
        %1339 = vmatpush.bf16.msra.mxu0 %v1327
        %1340 = vmatpush.bf16.msra.mxu0 %v1326
        %1341 = vmatpush.bf16.msra.mxu0 %v1325
        %1342 = vmatpush.bf16.msra.mxu0 %v1324
        %1343 = vmatmul.bf16.gmra.mxu0 %v1333
        %v1344 = vpop.f32.mrf.mxu0
        %v1345 = vadd.f32 %v1304, %v1344
        %v1346 = vpop.f32.mrf.mxu0
        %v1347 = vadd.f32 %v1306, %v1346
        %1348 = vdwg.mxu0
        %v1349 = vld [vmem:[%s809] sm:$0x1]
        %v1351 = vperm.slane %v1349, 0
        %v1353 = vadd.f32 %v1345, %v1351
        %v1354 = vadd.f32 %v1347, %v1351
        %v1355 = vadd.f32 %v1353, %v897
        %v1356 = vadd.f32 %v1354, %v898
        %v1357 = vld [vmem:[%s812] sm:$0x1]
        %v1358 = vld [vmem:[%s815] sm:$0x1]
        %1359 = vadd.xlane.f32.xlu0 %v1355
        %v1360 = vpop.xlane.xlu0 %1359
        %1361 = vadd.xlane.f32.xlu0 %v1356
        %v1362 = vpop.xlane.xlu0 %1361
        %v1363 = vrcp.pop 128.0
        %v1364 = vmul.f32 128.0, %v1363
        %v1365 = vsub.f32 1.0, %v1364
        %v1366 = vmul.f32 %v1363, %v1365
        %v1367 = vadd.f32 %v1363, %v1366
        %vm1368 = vweird.f32 %v1363
        %v1369 = vsel %vm1368, %v1363, %v1367
        %v1370 = vmul.f32 %v1360, %v1369
        %v1371 = vmul.f32 %v1362, %v1369
        %v1372 = vsub.f32 %v1355, %v1370
        %v1373 = vsub.f32 %v1356, %v1371
        %v1374 = vmul.f32 %v1372, %v1372
        %v1375 = vmul.f32 %v1373, %v1373
        %1376 = vadd.xlane.f32.xlu0 %v1374
        %v1377 = vpop.xlane.xlu0 %1376
        %1378 = vadd.xlane.f32.xlu0 %v1375
        %v1379 = vpop.xlane.xlu0 %1378
        %v1380 = vmul.f32 %v1377, %v1369
        %v1381 = vmul.f32 %v1379, %v1369
        %v1382 = vadd.f32 %v1380, 1e-12
        %v1383 = vadd.f32 %v1381, 1e-12
        %v1384 = vrsqrt.pop %v1382
        %v1385 = vmul.f32 %v1384, %v1382
        %v1386 = vmul.f32 %v1385, %v1384
        %v1387 = vmul.f32 0.5, %v1386
        %v1388 = vsub.f32 1.5, %v1387
        %v1389 = vmul.f32 %v1384, %v1388
        %vm1390 = vweird.f32 %v1382
        %vm1391 = vweird.f32 %v1384
        %vm1392 = vmor %vm1390, %vm1391
        %v1393 = vsel %vm1392, %v1384, %v1389
        %v1394 = vrsqrt.pop %v1383
        %v1395 = vmul.f32 %v1394, %v1383
        %v1396 = vmul.f32 %v1395, %v1394
        %v1397 = vmul.f32 0.5, %v1396
        %v1398 = vsub.f32 1.5, %v1397
        %v1399 = vmul.f32 %v1394, %v1398
        %vm1400 = vweird.f32 %v1383
        %vm1401 = vweird.f32 %v1394
        %vm1402 = vmor %vm1400, %vm1401
        %v1403 = vsel %vm1402, %v1394, %v1399
        %v1404 = vmul.f32 %v1372, %v1393
        %v1405 = vmul.f32 %v1373, %v1403
        %v1407 = vperm.slane %v1357, 0
        %v1409 = vmul.f32 %v1404, %v1407
        %v1410 = vmul.f32 %v1405, %v1407
        %v1412 = vperm.slane %v1358, 0
        %v1414 = vadd.f32 %v1409, %v1412
        %v1415 = vadd.f32 %v1410, %v1412
        %v1416 = vpack.c.bf16 %v1415, %v1414
        %v1417 = vld [vmem:[%s696] sm:$0xff]
        %v1418 = vld [vmem:[%s696 + $0x8] sm:$0xff]
        %v1419 = vld [vmem:[%s696 + $0x10] sm:$0xff]
        %v1420 = vld [vmem:[%s696 + $0x18] sm:$0xff]
        %v1421 = vld [vmem:[%s696 + $0x20] sm:$0xff]
        %v1422 = vld [vmem:[%s696 + $0x28] sm:$0xff]
        %v1423 = vld [vmem:[%s696 + $0x30] sm:$0xff]
        %v1424 = vld [vmem:[%s696 + $0x38] sm:$0xff]
        %v1425 = vld [vmem:[%s696 + $0x40] sm:$0xff]
        %v1426 = vld [vmem:[%s696 + $0x48] sm:$0xff]
        %v1427 = vld [vmem:[%s696 + $0x50] sm:$0xff]
        %v1428 = vld [vmem:[%s696 + $0x58] sm:$0xff]
        %v1429 = vld [vmem:[%s696 + $0x60] sm:$0xff]
        %v1430 = vld [vmem:[%s696 + $0x68] sm:$0xff]
        %v1431 = vld [vmem:[%s696 + $0x70] sm:$0xff]
        %v1432 = vld [vmem:[%s696 + $0x78] sm:$0xff]
        %v1433 = vld [vmem:[%s819] sm:$0x3]
        %v1435 = vperm.slane %v1433, 0
        %v1436 = vperm.slane %v1433, 1
        %v1455 = vunpack.c.l.b16 %v1417
        %v1456 = vunpack.c.h.b16 %v1417
        %v1457 = vunpack.c.l.b16 %v1418
        %v1458 = vunpack.c.h.b16 %v1418
        %v1459 = vunpack.c.l.b16 %v1419
        %v1460 = vunpack.c.h.b16 %v1419
        %v1461 = vunpack.c.l.b16 %v1420
        %v1462 = vunpack.c.h.b16 %v1420
        %v1463 = vunpack.c.l.b16 %v1421
        %v1464 = vunpack.c.h.b16 %v1421
        %v1465 = vunpack.c.l.b16 %v1422
        %v1466 = vunpack.c.h.b16 %v1422
        %v1467 = vunpack.c.l.b16 %v1423
        %v1468 = vunpack.c.h.b16 %v1423
        %v1469 = vunpack.c.l.b16 %v1424
        %v1470 = vunpack.c.h.b16 %v1424
        %v1471 = vunpack.c.l.b16 %v1425
        %v1472 = vunpack.c.h.b16 %v1425
        %v1473 = vunpack.c.l.b16 %v1426
        %v1474 = vunpack.c.h.b16 %v1426
        %v1475 = vunpack.c.l.b16 %v1427
        %v1476 = vunpack.c.h.b16 %v1427
        %v1477 = vunpack.c.l.b16 %v1428
        %v1478 = vunpack.c.h.b16 %v1428
        %v1479 = vunpack.c.l.b16 %v1429
        %v1480 = vunpack.c.h.b16 %v1429
        %v1481 = vunpack.c.l.b16 %v1430
        %v1482 = vunpack.c.h.b16 %v1430
        %v1483 = vunpack.c.l.b16 %v1431
        %v1484 = vunpack.c.h.b16 %v1431
        %v1485 = vunpack.c.l.b16 %v1432
        %v1486 = vunpack.c.h.b16 %v1432
        %v1487 = vpack.c.b16 %v1457, %v1455
        %v1488 = vpack.c.b16 %v1458, %v1456
        %v1489 = vpack.c.b16 %v1461, %v1459
        %v1490 = vpack.c.b16 %v1462, %v1460
        %v1491 = vpack.c.b16 %v1465, %v1463
        %v1492 = vpack.c.b16 %v1466, %v1464
        %v1493 = vpack.c.b16 %v1469, %v1467
        %v1494 = vpack.c.b16 %v1470, %v1468
        %v1495 = vpack.c.b16 %v1473, %v1471
        %v1496 = vpack.c.b16 %v1474, %v1472
        %v1497 = vpack.c.b16 %v1477, %v1475
        %v1498 = vpack.c.b16 %v1478, %v1476
        %v1499 = vpack.c.b16 %v1481, %v1479
        %v1500 = vpack.c.b16 %v1482, %v1480
        %v1501 = vpack.c.b16 %v1485, %v1483
        %v1502 = vpack.c.b16 %v1486, %v1484
        %1519 = vmatpush.bf16.msra.mxu0 %v1501
        %1520 = vmatpush.bf16.msra.mxu0 %v1499
        %1521 = vmatpush.bf16.msra.mxu0 %v1497
        %1522 = vmatpush.bf16.msra.mxu0 %v1495
        %1523 = vmatpush.bf16.msra.mxu0 %v1493
        %1524 = vmatpush.bf16.msra.mxu0 %v1491
        %1525 = vmatpush.bf16.msra.mxu0 %v1489
        %1526 = vmatpush.bf16.msra.mxu0 %v1487
        %1527 = vmatmul.bf16.gmra.mxu0 %v1416
        %v1528 = vpop.f32.mrf.mxu0
        %v1529 = vadd.f32 %v1435, %v1528
        %v1530 = vpop.f32.mrf.mxu0
        %v1531 = vadd.f32 %v1435, %v1530
        %1532 = vdwg.mxu0
        %1533 = vmatpush.bf16.msra.mxu0 %v1502
        %1534 = vmatpush.bf16.msra.mxu0 %v1500
        %1535 = vmatpush.bf16.msra.mxu0 %v1498
        %1536 = vmatpush.bf16.msra.mxu0 %v1496
        %1537 = vmatpush.bf16.msra.mxu0 %v1494
        %1538 = vmatpush.bf16.msra.mxu0 %v1492
        %1539 = vmatpush.bf16.msra.mxu0 %v1490
        %1540 = vmatpush.bf16.msra.mxu0 %v1488
        %1541 = vmatmul.bf16.gmra.mxu0 %v1416
        %v1542 = vpop.f32.mrf.mxu0
        %v1543 = vadd.f32 %v1436, %v1542
        %v1544 = vpop.f32.mrf.mxu0
        %v1545 = vadd.f32 %v1436, %v1544
        %1546 = vdwg.mxu0
        %v1547 = vmul.f32 %v1529, 0.5
        %v1548 = vmul.f32 %v1543, 0.5
        %v1549 = vmul.f32 %v1531, 0.5
        %v1550 = vmul.f32 %v1545, 0.5
        %v1551 = vmul.f32 %v1529, 0.044715
        %v1552 = vmul.f32 %v1543, 0.044715
        %v1553 = vmul.f32 %v1531, 0.044715
        %v1554 = vmul.f32 %v1545, 0.044715
        %v1555 = vmul.f32 %v1551, %v1529
        %v1556 = vmul.f32 %v1552, %v1543
        %v1557 = vmul.f32 %v1553, %v1531
        %v1558 = vmul.f32 %v1554, %v1545
        %v1559 = vmul.f32 %v1555, %v1529
        %v1560 = vmul.f32 %v1556, %v1543
        %v1561 = vmul.f32 %v1557, %v1531
        %v1562 = vmul.f32 %v1558, %v1545
        %v1563 = vadd.f32 %v1529, %v1559
        %v1564 = vadd.f32 %v1543, %v1560
        %v1565 = vadd.f32 %v1531, %v1561
        %v1566 = vadd.f32 %v1545, %v1562
        %v1567 = vmul.f32 %v1563, 0.7978846
        %v1568 = vmul.f32 %v1564, 0.7978846
        %v1569 = vmul.f32 %v1565, 0.7978846
        %v1570 = vmul.f32 %v1566, 0.7978846
        %v1571 = vtanh.pop %v1567
        %v1572 = vtanh.pop %v1568
        %v1573 = vtanh.pop %v1569
        %v1574 = vtanh.pop %v1570
        %v1575 = vadd.f32 %v1571, 1.0
        %v1576 = vadd.f32 %v1572, 1.0
        %v1577 = vadd.f32 %v1573, 1.0
        %v1578 = vadd.f32 %v1574, 1.0
        %v1579 = vmul.f32 %v1547, %v1575
        %v1580 = vmul.f32 %v1548, %v1576
        %v1581 = vmul.f32 %v1549, %v1577
        %v1582 = vmul.f32 %v1550, %v1578
        %v1583 = vpack.c.bf16 %v1581, %v1579
        %v1584 = vpack.c.bf16 %v1582, %v1580
        %v1585 = vld [vmem:[%s706] sm:$0xf]
        %v1586 = vld [vmem:[%s706 + $0x4] sm:$0xf]
        %v1587 = vld [vmem:[%s706 + $0x8] sm:$0xf]
        %v1588 = vld [vmem:[%s706 + $0xc] sm:$0xf]
        %v1589 = vld [vmem:[%s706 + $0x10] sm:$0xf]
        %v1590 = vld [vmem:[%s706 + $0x14] sm:$0xf]
        %v1591 = vld [vmem:[%s706 + $0x18] sm:$0xf]
        %v1592 = vld [vmem:[%s706 + $0x1c] sm:$0xf]
        %v1593 = vld [vmem:[%s706 + $0x20] sm:$0xf]
        %v1594 = vld [vmem:[%s706 + $0x24] sm:$0xf]
        %v1595 = vld [vmem:[%s706 + $0x28] sm:$0xf]
        %v1596 = vld [vmem:[%s706 + $0x2c] sm:$0xf]
        %v1597 = vld [vmem:[%s706 + $0x30] sm:$0xf]
        %v1598 = vld [vmem:[%s706 + $0x34] sm:$0xf]
        %v1599 = vld [vmem:[%s706 + $0x38] sm:$0xf]
        %v1600 = vld [vmem:[%s706 + $0x3c] sm:$0xf]
        %v1601 = vld [vmem:[%s706 + $0x40] sm:$0xf]
        %v1602 = vld [vmem:[%s706 + $0x44] sm:$0xf]
        %v1603 = vld [vmem:[%s706 + $0x48] sm:$0xf]
        %v1604 = vld [vmem:[%s706 + $0x4c] sm:$0xf]
        %v1605 = vld [vmem:[%s706 + $0x50] sm:$0xf]
        %v1606 = vld [vmem:[%s706 + $0x54] sm:$0xf]
        %v1607 = vld [vmem:[%s706 + $0x58] sm:$0xf]
        %v1608 = vld [vmem:[%s706 + $0x5c] sm:$0xf]
        %v1609 = vld [vmem:[%s706 + $0x60] sm:$0xf]
        %v1610 = vld [vmem:[%s706 + $0x64] sm:$0xf]
        %v1611 = vld [vmem:[%s706 + $0x68] sm:$0xf]
        %v1612 = vld [vmem:[%s706 + $0x6c] sm:$0xf]
        %v1613 = vld [vmem:[%s706 + $0x70] sm:$0xf]
        %v1614 = vld [vmem:[%s706 + $0x74] sm:$0xf]
        %v1615 = vld [vmem:[%s706 + $0x78] sm:$0xf]
        %v1616 = vld [vmem:[%s706 + $0x7c] sm:$0xf]
        %v1617 = vld [vmem:[%s822] sm:$0x1]
        %v1619 = vperm.slane %v1617, 0
        %v1653 = vunpack.c.l.b16 %v1585
        %v1654 = vunpack.c.l.b16 %v1586
        %v1655 = vunpack.c.l.b16 %v1587
        %v1656 = vunpack.c.l.b16 %v1588
        %v1657 = vunpack.c.l.b16 %v1589
        %v1658 = vunpack.c.l.b16 %v1590
        %v1659 = vunpack.c.l.b16 %v1591
        %v1660 = vunpack.c.l.b16 %v1592
        %v1661 = vunpack.c.l.b16 %v1593
        %v1662 = vunpack.c.l.b16 %v1594
        %v1663 = vunpack.c.l.b16 %v1595
        %v1664 = vunpack.c.l.b16 %v1596
        %v1665 = vunpack.c.l.b16 %v1597
        %v1666 = vunpack.c.l.b16 %v1598
        %v1667 = vunpack.c.l.b16 %v1599
        %v1668 = vunpack.c.l.b16 %v1600
        %v1669 = vunpack.c.l.b16 %v1601
        %v1670 = vunpack.c.l.b16 %v1602
        %v1671 = vunpack.c.l.b16 %v1603
        %v1672 = vunpack.c.l.b16 %v1604
        %v1673 = vunpack.c.l.b16 %v1605
        %v1674 = vunpack.c.l.b16 %v1606
        %v1675 = vunpack.c.l.b16 %v1607
        %v1676 = vunpack.c.l.b16 %v1608
        %v1677 = vunpack.c.l.b16 %v1609
        %v1678 = vunpack.c.l.b16 %v1610
        %v1679 = vunpack.c.l.b16 %v1611
        %v1680 = vunpack.c.l.b16 %v1612
        %v1681 = vunpack.c.l.b16 %v1613
        %v1682 = vunpack.c.l.b16 %v1614
        %v1683 = vunpack.c.l.b16 %v1615
        %v1684 = vunpack.c.l.b16 %v1616
        %v1685 = vpack.c.b16 %v1654, %v1653
        %v1686 = vpack.c.b16 %v1656, %v1655
        %v1687 = vpack.c.b16 %v1658, %v1657
        %v1688 = vpack.c.b16 %v1660, %v1659
        %v1689 = vpack.c.b16 %v1662, %v1661
        %v1690 = vpack.c.b16 %v1664, %v1663
        %v1691 = vpack.c.b16 %v1666, %v1665
        %v1692 = vpack.c.b16 %v1668, %v1667
        %v1693 = vpack.c.b16 %v1670, %v1669
        %v1694 = vpack.c.b16 %v1672, %v1671
        %v1695 = vpack.c.b16 %v1674, %v1673
        %v1696 = vpack.c.b16 %v1676, %v1675
        %v1697 = vpack.c.b16 %v1678, %v1677
        %v1698 = vpack.c.b16 %v1680, %v1679
        %v1699 = vpack.c.b16 %v1682, %v1681
        %v1700 = vpack.c.b16 %v1684, %v1683
        %1717 = vmatpush.bf16.msra.mxu0 %v1692
        %1718 = vmatpush.bf16.msra.mxu0 %v1691
        %1719 = vmatpush.bf16.msra.mxu0 %v1690
        %1720 = vmatpush.bf16.msra.mxu0 %v1689
        %1721 = vmatpush.bf16.msra.mxu0 %v1688
        %1722 = vmatpush.bf16.msra.mxu0 %v1687
        %1723 = vmatpush.bf16.msra.mxu0 %v1686
        %1724 = vmatpush.bf16.msra.mxu0 %v1685
        %1725 = vmatmul.bf16.gmra.mxu0 %v1583
        %v1726 = vpop.f32.mrf.mxu0
        %v1727 = vadd.f32 %v1619, %v1726
        %v1728 = vpop.f32.mrf.mxu0
        %v1729 = vadd.f32 %v1619, %v1728
        %1730 = vdwg.mxu0
        %1731 = vmatpush.bf16.msra.mxu0 %v1700
        %1732 = vmatpush.bf16.msra.mxu0 %v1699
        %1733 = vmatpush.bf16.msra.mxu0 %v1698
        %1734 = vmatpush.bf16.msra.mxu0 %v1697
        %1735 = vmatpush.bf16.msra.mxu0 %v1696
        %1736 = vmatpush.bf16.msra.mxu0 %v1695
        %1737 = vmatpush.bf16.msra.mxu0 %v1694
        %1738 = vmatpush.bf16.msra.mxu0 %v1693
        %1739 = vmatmul.bf16.gmra.mxu0 %v1584
        %v1740 = vpop.f32.mrf.mxu0
        %v1741 = vadd.f32 %v1727, %v1740
        %v1742 = vpop.f32.mrf.mxu0
        %v1743 = vadd.f32 %v1729, %v1742
        %1744 = vdwg.mxu0
        %v1745 = vadd.f32 %v1741, %v1414
        %v1746 = vadd.f32 %v1743, %v1415
        %v1747 = vld [vmem:[%s825] sm:$0x1]
        %v1748 = vld [vmem:[%s828] sm:$0x1]
        %1749 = vadd.xlane.f32.xlu0 %v1745
        %v1750 = vpop.xlane.xlu0 %1749
        %1751 = vadd.xlane.f32.xlu0 %v1746
        %v1752 = vpop.xlane.xlu0 %1751
        %v1753 = vmul.f32 %v1750, %v1369
        %v1754 = vmul.f32 %v1752, %v1369
        %v1755 = vsub.f32 %v1745, %v1753
        %v1756 = vsub.f32 %v1746, %v1754
        %v1757 = vmul.f32 %v1755, %v1755
        %v1758 = vmul.f32 %v1756, %v1756
        %1759 = vadd.xlane.f32.xlu0 %v1757
        %v1760 = vpop.xlane.xlu0 %1759
        %1761 = vadd.xlane.f32.xlu0 %v1758
        %v1762 = vpop.xlane.xlu0 %1761
        %v1763 = vmul.f32 %v1760, %v1369
        %v1764 = vmul.f32 %v1762, %v1369
        %v1765 = vadd.f32 %v1763, 1e-12
        %v1766 = vadd.f32 %v1764, 1e-12
        %v1767 = vrsqrt.pop %v1765
        %v1768 = vmul.f32 %v1767, %v1765
        %v1769 = vmul.f32 %v1768, %v1767
        %v1770 = vmul.f32 0.5, %v1769
        %v1771 = vsub.f32 1.5, %v1770
        %v1772 = vmul.f32 %v1767, %v1771
        %vm1773 = vweird.f32 %v1765
        %vm1774 = vweird.f32 %v1767
        %vm1775 = vmor %vm1773, %vm1774
        %v1776 = vsel %vm1775, %v1767, %v1772
        %v1777 = vrsqrt.pop %v1766
        %v1778 = vmul.f32 %v1777, %v1766
        %v1779 = vmul.f32 %v1778, %v1777
        %v1780 = vmul.f32 0.5, %v1779
        %v1781 = vsub.f32 1.5, %v1780
        %v1782 = vmul.f32 %v1777, %v1781
        %vm1783 = vweird.f32 %v1766
        %vm1784 = vweird.f32 %v1777
        %vm1785 = vmor %vm1783, %vm1784
        %v1786 = vsel %vm1785, %v1777, %v1782
        %v1787 = vmul.f32 %v1755, %v1776
        %v1788 = vmul.f32 %v1756, %v1786
        %v1790 = vperm.slane %v1747, 0
        %v1792 = vmul.f32 %v1787, %v1790
        %v1793 = vmul.f32 %v1788, %v1790
        %v1795 = vperm.slane %v1748, 0
        %v1797 = vadd.f32 %v1792, %v1795
        %v1798 = vadd.f32 %v1793, %v1795
        %1799 = vst [vmem:[#allocation2] sm:$0xff] %v1797
        %1800 = vst [vmem:[#allocation2 + $0x8] sm:$0xff] %v1798
        %p1801 = scmp.eq.s32.totalorder %s39, 1
        // Predicated region
        $region109: #{base_encoder_forward.1} parent=91 // pred_check
          %p1802 = pneg %p1801
        $region110: #{base_encoder_forward.1} parent=91 // pred_check_branch
          %1804 = sbr.rel (%p1802) target = $region112
        $region111: #{base_encoder_forward.1} parent=91 // pred_region
          %1805 = vst [vmem:[#allocation9] sm:$0xff] %v1797
          %1806 = vst [vmem:[#allocation9 + $0x8] sm:$0xff] %v1798
          %v1807 = vpack.c.bf16 %v1797, %v1797
          %v1808 = vpack.c.bf16 %v1798, %v1798
          %v1809 = vld [vmem:[%s16] sm:$0xf]
          %v1810 = vld [vmem:[%s16 + $0x4] sm:$0xf]
          %v1811 = vld [vmem:[%s16 + $0x8] sm:$0xf]
          %v1812 = vld [vmem:[%s16 + $0xc] sm:$0xf]
          %v1813 = vld [vmem:[%s16 + $0x10] sm:$0xf]
          %v1814 = vld [vmem:[%s16 + $0x14] sm:$0xf]
          %v1815 = vld [vmem:[%s16 + $0x18] sm:$0xf]
          %v1816 = vld [vmem:[%s16 + $0x1c] sm:$0xf]
          %v1817 = vld [vmem:[%s16 + $0x20] sm:$0xf]
          %v1818 = vld [vmem:[%s16 + $0x24] sm:$0xf]
          %v1819 = vld [vmem:[%s16 + $0x28] sm:$0xf]
          %v1820 = vld [vmem:[%s16 + $0x2c] sm:$0xf]
          %v1821 = vld [vmem:[%s16 + $0x30] sm:$0xf]
          %v1822 = vld [vmem:[%s16 + $0x34] sm:$0xf]
          %v1823 = vld [vmem:[%s16 + $0x38] sm:$0xf]
          %v1824 = vld [vmem:[%s16 + $0x3c] sm:$0xf]
          %v1825 = vld [vmem:[%s17] sm:$0x1]
          %v1827 = vperm.slane %v1825, 0
          %v1831 = vunpack.c.l.b16 %v1807
          %v1832 = vunpack.c.l.b16 %v1808
          %v1833 = vrot.slane %v1832, 7
          %vm1834 = vcmask 1041409
          %v1835 = vsel %vm1834, %v1833, %v1831
          %v1836 = vpack.c.b16 %v1835, %v1835
          %v1854 = vunpack.c.l.b16 %v1809
          %v1855 = vunpack.c.l.b16 %v1810
          %v1856 = vunpack.c.l.b16 %v1811
          %v1857 = vunpack.c.l.b16 %v1812
          %v1858 = vunpack.c.l.b16 %v1813
          %v1859 = vunpack.c.l.b16 %v1814
          %v1860 = vunpack.c.l.b16 %v1815
          %v1861 = vunpack.c.l.b16 %v1816
          %v1862 = vunpack.c.l.b16 %v1817
          %v1863 = vunpack.c.l.b16 %v1818
          %v1864 = vunpack.c.l.b16 %v1819
          %v1865 = vunpack.c.l.b16 %v1820
          %v1866 = vunpack.c.l.b16 %v1821
          %v1867 = vunpack.c.l.b16 %v1822
          %v1868 = vunpack.c.l.b16 %v1823
          %v1869 = vunpack.c.l.b16 %v1824
          %v1870 = vpack.c.b16 %v1855, %v1854
          %v1871 = vpack.c.b16 %v1857, %v1856
          %v1872 = vpack.c.b16 %v1859, %v1858
          %v1873 = vpack.c.b16 %v1861, %v1860
          %v1874 = vpack.c.b16 %v1863, %v1862
          %v1875 = vpack.c.b16 %v1865, %v1864
          %v1876 = vpack.c.b16 %v1867, %v1866
          %v1877 = vpack.c.b16 %v1869, %v1868
          %1886 = vmatpush.bf16.msra.mxu0 %v1877
          %1887 = vmatpush.bf16.msra.mxu0 %v1876
          %1888 = vmatpush.bf16.msra.mxu0 %v1875
          %1889 = vmatpush.bf16.msra.mxu0 %v1874
          %1890 = vmatpush.bf16.msra.mxu0 %v1873
          %1891 = vmatpush.bf16.msra.mxu0 %v1872
          %1892 = vmatpush.bf16.msra.mxu0 %v1871
          %1893 = vmatpush.bf16.msra.mxu0 %v1870
          %1894 = vmatmul.bf16.gmra.mxu0 %v1836
          %v1895 = vpop.f32.mrf.mxu0
          %v1896 = vadd.f32 %v1827, %v1895
          %v1897 = vpop.f32.mrf.mxu0
          %1898 = vdwg.mxu0
          %v1899 = vtanh.pop %v1896
          %1900 = vst [vmem:[#allocation10] sm:$0x3] %v1899
        $region112: #{base_encoder_forward.1} parent=91 // pred_fallthru
          _
        // Predicated region
        $region113: #{base_encoder_forward.1} parent=91 // pred_check
          %p1901 = pneg %p490
        $region114: #{base_encoder_forward.1} parent=91 // pred_check_branch
          %1903 = sbr.rel (%p1901) target = $region116
        $region115: #{base_encoder_forward.1} parent=91 // pred_region
          %1905 = vsyncadd [#allocation5], 0
          %s1906 = sshll.u32 [#allocation9], 4
          %s1907 = int_to_ptr.vmem [resolvable:$true] %s1906
          %s1908 = sshll.u32 %s18, 4
          %s1909 = int_to_ptr.hbm [resolvable:$true] %s1908
          %1914 = dma.vmem_to_hbm [thread:$0]  %s1907, 256, %s1909, [#allocation5], 128, 128, 8
        $region116: #{base_encoder_forward.1} parent=91 // pred_fallthru
          _
        // Predicated region
        $region117: #{base_encoder_forward.1} parent=91 // pred_check
          %p1915 = pneg %p511
        $region118: #{base_encoder_forward.1} parent=91 // pred_check_branch
          %1917 = sbr.rel (%p1915) target = $region120
        $region119: #{base_encoder_forward.1} parent=91 // pred_region
          %1919 = vsyncadd [#allocation11], 0
          %s1921 = sshll.u32 [#allocation10], 4
          %s1922 = int_to_ptr.vmem [resolvable:$true] %s1921
          %s1923 = sshll.u32 %s19, 4
          %s1924 = int_to_ptr.hbm [resolvable:$true] %s1923
          %1926 = dma.vmem_to_hbm [thread:$0]  %s1922, 32, %s1924, [#allocation11]
        $region120: #{base_encoder_forward.1} parent=91 // pred_fallthru
          _
        // Predicated region
        $region121: #{base_encoder_forward.1} parent=91 // pred_check
          %p1927 = pneg %p490
        $region122: #{base_encoder_forward.1} parent=91 // pred_check_branch
          %1929 = sbr.rel (%p1927) target = $region124
        $region123: #{base_encoder_forward.1} parent=91 // pred_region
          %1931 = dma.done [#allocation5], 256
        $region124: #{base_encoder_forward.1} parent=91 // pred_fallthru
          _
        // Predicated region
        $region125: #{base_encoder_forward.1} parent=91 // pred_check
          %p1932 = pneg %p511
        $region126: #{base_encoder_forward.1} parent=91 // pred_check_branch
          %1934 = sbr.rel (%p1932) target = $region128
        $region127: #{base_encoder_forward.1} parent=91 // pred_region
          %1936 = dma.done [#allocation11], 32
        $region128: #{base_encoder_forward.1} parent=91 // pred_fallthru
          _
      $region92: #{base_encoder_forward.1} parent=5 // pred_fallthru
        _
      %p1937 = scmp.le.s32.totalorder 2, %s34
      // Predicated region
      $region129: #{base_encoder_forward.1} parent=5 // pred_check
        %p1938 = pneg %p1937
      $region130: #{base_encoder_forward.1} parent=5 // pred_check_branch
        %1940 = sbr.rel (%p1938) target = $region132
      $region131: #{base_encoder_forward.1} parent=5 // pred_region
        %s1941 = ssub.s32 %s34, 2
      $region132: #{base_encoder_forward.1} parent=5 // pred_fallthru
        _
    $region6: #{base_encoder_forward.1} parent=1 // loop_footer
      %s38 = sadd.s32 1, %s34
    $region7: #{base_encoder_forward.1} parent=1 // loop_footer_branch
      %33 = sbr.rel target = $region3
    $region8: #{base_encoder_forward.1} parent=1 // loop_exit
      _
    %1942 = vsyncpa [#allocation4], 1
    %s1943 = scalar_lea.sflag [#allocation4], 1
    %1944 = vsyncpa %s1943, 1
    %1945 = vsyncpa [#allocation7], 1
    %s1946 = scalar_lea.sflag [#allocation7], 1
    %1947 = vsyncpa %s1946, 1
    %1948 = vsyncpa [#allocation5], 1
    %s1949 = scalar_lea.sflag [#allocation5], 1
    %1950 = vsyncpa %s1949, 1
    %1951 = vsyncpa [#allocation11], 1

</llo_original>
